<compile_context>
chip_gen: v7x
topology: tpu7x:2x2x1
jax: 0.10.0
libtpu: 0.0.40
codegen_flags: <defaults>
</compile_context>

<pallas_src>
import jax
import jax.numpy as jnp
from jax import lax
from jax.experimental import pallas as pl
from jax.experimental.pallas import tpu as pltpu

RADIUS = 10.0

# dot_general dimension numbers
_DIMS_CONTRACT_LAST = (((1,), (1,)), ((), ()))   # lhs[o,d] * rhs[j,d] -> [o,j]  (x is [tb, D])
_DIMS_STANDARD = (((1,), (0,)), ((), ()))        # ordinary matmul               (h is [D, tb])


# ----------------------------------------------------------------------------- kernel

def _sp_layer(x_in, wt, bt, sel_last, sel_perp, out_row_last, dims):
    """One SP_layer forward (eval) in batch-on-lanes layout.

    x_in:  [tb, D] (dims=_DIMS_CONTRACT_LAST) or [D, tb] (dims=_DIMS_STANDARD)
    wt:    [Do, D] padded [out, in] linear weight (row Do-1 = 0, input col D-1 = 0)
    bt:    [Do, 1] padded bias (entry Do-1 = 0)
    sel_last / sel_perp: [1, D] selector rows (last feature / all-but-last).
    out_row_last: [Do, 1] bool mask of the appended "cos" output row.
    Returns [Do, tb] on the radius-r sphere.
    """
    r = RADIUS
    f32 = jnp.float32

    # Per-sample scalars, all lane-dense [1, tb].
    x_last = lax.dot_general(sel_last, x_in, dims, preferred_element_type=f32)
    xperp2 = lax.dot_general(sel_perp, x_in * x_in, dims, preferred_element_type=f32)
    xn2 = xperp2 + x_last * x_last

    # --- log map about o = r*e_{D-1}: c = cos_sim(x, o); theta = acos(shrink(c)) ---
    c = x_last * lax.rsqrt(jnp.maximum(xn2, (1e-8 / r) ** 2))
    eps_s = 1e-4
    c = jnp.where(jnp.abs(c) > 1.0 - eps_s, c * (1.0 - eps_s), c)
    theta = jnp.arctan2(jnp.sqrt(jnp.maximum(1.0 - c * c, 0.0)), c)    # acos(c)
    d_last = x_last - c * r
    dist2 = xperp2 + d_last * d_last          # ||x - c*o||^2, cancellation-resistant
    inv_d = lax.rsqrt(jnp.maximum(dist2, 1e-24))
    scale = (r * theta) * inv_d               # [1, tb]

    # --- Linear (dropout = eval-mode identity).  The per-sample scale is constant
    #     along the contracted feature axis so it commutes with the matmul. ---
    vraw = lax.dot_general(wt, x_in, dims, preferred_element_type=f32)  # [Do, tb]
    v = scale * vraw + bt

    # --- exp map back onto the sphere.  Row Do-1 of v is exactly 0 (zero weight
    #     row + zero bias entry), so vn2 needs no masking. ---
    vn2 = jnp.sum(v * v, axis=0, keepdims=True)                        # [1, tb]
    inv_vn = lax.rsqrt(jnp.maximum(vn2, 1e-24))
    th = (vn2 * inv_vn) * (1.0 / r)           # = ||v|| / r
    sin_t = jnp.sin(th)
    cos_t = jnp.cos(th)
    out = jnp.where(out_row_last, cos_t * r, (sin_t * r) * (v * inv_vn))   # [Do, tb]

    # --- srelu: r * normalize(relu(out)) ---
    xr = jnp.maximum(out, 0.0)
    xrn2 = jnp.sum(xr * xr, axis=0, keepdims=True)
    return (r * xr) * lax.rsqrt(jnp.maximum(xrn2, 1e-24))


def adv_kernel(x_ref, w1_ref, b1_ref, w2_ref, b2_ref, w3n_ref, out_ref):
    f32 = jnp.float32
    d_in = x_ref.shape[1]
    do = w1_ref.shape[0]

    # Constant selector rows / masks, built once per grid step (both SP layers
    # share the same output width, so one out-row mask suffices).
    lane1 = lax.broadcasted_iota(jnp.int32, (1, d_in), 1)
    sel_last1 = (lane1 == d_in - 1).astype(f32)
    sel_perp1 = 1.0 - sel_last1
    lane2 = lax.broadcasted_iota(jnp.int32, (1, do), 1)
    sel_last2 = (lane2 == do - 1).astype(f32)
    sel_perp2 = 1.0 - sel_last2
    out_row_last = lax.broadcasted_iota(jnp.int32, (do, 1), 0) == do - 1

    h = _sp_layer(x_ref[...], w1_ref[...], b1_ref[...],
                  sel_last1, sel_perp1, out_row_last, _DIMS_CONTRACT_LAST)
    h = _sp_layer(h, w2_ref[...], b2_ref[...],
                  sel_last2, sel_perp2, out_row_last, _DIMS_STANDARD)

    # SLR: logits = normalize(W3) @ h   (bias term is 0 * tanh(b) = 0).
    logits = jnp.dot(w3n_ref[...], h, preferred_element_type=f32)      # [1, tb]
    # sigmoid(z) = 0.5 * (tanh(z/2) + 1): one EUP op instead of exp + reciprocal.
    out_ref[...] = 0.5 * (jnp.tanh(0.5 * logits) + 1.0)


# ----------------------------------------------------------------------------- wrapper

def _cdiv(a, b):
    return -(-a // b)


def _round_up(n, m):
    return _cdiv(n, m) * m


def adversarial_network_sp(x, w1, b1, w2, b2, w3, *, block_b=4096):
    """x: [B, in_feature]; w1: [hidden, in_feature-1]; b1: [hidden];
       w2: [hidden, hidden]; b2: [hidden]; w3: [1, hidden+1].
       Returns sigmoid outputs [B, 1]."""
    f32 = jnp.float32
    B, d_in = x.shape
    H = w1.shape[0]
    do = H + 1

    x = x.astype(f32)

    # Padded [out, in] weights: zero last output row (the appended cos slot) and
    # zero last input column (the log-map's dropped component).  Biases as [Do,1].
    w1t = jnp.zeros((do, d_in), f32).at[:H, :d_in - 1].set(w1.astype(f32))
    b1t = jnp.zeros((do, 1), f32).at[:H, 0].set(b1.astype(f32))
    w2t = jnp.zeros((do, do), f32).at[:H, :H].set(w2.astype(f32))
    b2t = jnp.zeros((do, 1), f32).at[:H, 0].set(b2.astype(f32))
    # SLR: hoist the data-independent row normalization out of the kernel.
    w3f = w3.astype(f32)
    w3n = w3f * lax.rsqrt(
        jnp.maximum(jnp.sum(w3f * w3f, axis=1, keepdims=True), 1e-24))   # [1, Do]

    # Batch-tile (lane-axis) size.  No jnp.pad: small B uses one full-array block
    # (always a legal BlockSpec); large B uses 256-multiples with a ragged final
    # block whose garbage lanes are never written back.
    if B <= 256:
        tb = B
    else:
        tb = min(block_b, _round_up(B, 256))
        if _cdiv(B, tb) < 2:
            # Keep >= 2 grid steps so v7x's two TensorCores both get a share.
            tb = _round_up(_cdiv(B, 2), 256)
    grid = (_cdiv(B, tb),)

    out = pl.pallas_call(
        adv_kernel,
        out_shape=jax.ShapeDtypeStruct((1, B), f32),
        grid=grid,
        in_specs=[
            pl.BlockSpec((tb, d_in), lambda i: (i, 0)),   # x batch tile (streamed)
            pl.BlockSpec((do, d_in), lambda i: (0, 0)),   # w1 (padded, resident)
            pl.BlockSpec((do, 1), lambda i: (0, 0)),      # b1 (padded)
            pl.BlockSpec((do, do), lambda i: (0, 0)),     # w2 (padded, resident)
            pl.BlockSpec((do, 1), lambda i: (0, 0)),      # b2 (padded)
            pl.BlockSpec((1, do), lambda i: (0, 0)),      # normalized w3 row
        ],
        out_specs=pl.BlockSpec((1, tb), lambda i: (0, i)),
        compiler_params=pltpu.CompilerParams(
            dimension_semantics=("parallel",),
            vmem_limit_bytes=32 * 1024 * 1024),
    )(x, w1t, b1t, w2t, b2t, w3n)
    return out.reshape(B, 1)


# ----------------------------------------------------------------------------- reference
# Pure-JAX reference that follows the original (unpadded) PyTorch math.

def _ref_sp_layer(x, w, b, r):
    f32 = jnp.float32
    B, D = x.shape
    xn = jnp.linalg.norm(x, axis=1, keepdims=True)
    x_last = x[:, D - 1:D]
    c = (x_last * r) / jnp.maximum(xn * r, 1e-8)
    eps_s = 1e-4
    c = jnp.where(jnp.abs(c) > 1.0 - eps_s, c * (1.0 - eps_s), c)
    theta = jnp.arccos(c)
    o = jnp.concatenate([jnp.zeros((1, D - 1), f32), jnp.full((1, 1), r, f32)], axis=1)
    diff = x - c * o
    diff = diff / jnp.maximum(jnp.linalg.norm(diff, axis=1, keepdims=True), 1e-12)
    v = r * theta * diff[:, :D - 1]
    v = v @ w.T + b[None, :]
    vn = jnp.linalg.norm(v, axis=1, keepdims=True)
    th = vn / r
    v_full = jnp.concatenate([v, jnp.zeros((B, 1), f32)], axis=1)
    v_unit = v_full / jnp.maximum(jnp.linalg.norm(v_full, axis=1, keepdims=True), 1e-12)
    o2 = jnp.concatenate([jnp.zeros((1, v.shape[1]), f32), jnp.full((1, 1), r, f32)], axis=1)
    out = jnp.cos(th) * o2 + jnp.sin(th) * v_unit * r
    xr = jnp.maximum(out, 0.0)
    return r * xr / jnp.maximum(jnp.linalg.norm(xr, axis=1, keepdims=True), 1e-12)


def _ref_forward(x, w1, b1, w2, b2, w3):
    h = _ref_sp_layer(x.astype(jnp.float32), w1, b1, RADIUS)
    h = _ref_sp_layer(h, w2, b2, RADIUS)
    w3n = w3 / jnp.maximum(jnp.linalg.norm(w3, axis=1, keepdims=True), 1e-12)
    return jax.nn.sigmoid(h @ w3n.T)


# ----------------------------------------------------------------------------- demo

if __name__ == "__main__":
    key = jax.random.PRNGKey(0)
    B, IN_FEATURE, HIDDEN = 8, 32, 32          # SP(32->33), SP(33->33), SLR(33->1)
    kx, k1, k2, k3 = jax.random.split(key, 4)

    x = jax.random.normal(kx, (B, IN_FEATURE), jnp.float32)

    # Deterministic parameter init matching the PyTorch shapes / schemes:
    # ad_layer1.linear: Linear(in_feature-1, hidden) -> xavier_normal weight, zero bias
    fan_in1, fan_out1 = IN_FEATURE - 1, HIDDEN
    w1 = jax.random.normal(k1, (fan_out1, fan_in1), jnp.float32) * jnp.sqrt(
        2.0 / (fan_in1 + fan_out1))
    b1 = jnp.zeros((fan_out1,), jnp.float32)
    # ad_layer2.linear: Linear(hidden, hidden)
    w2 = jax.random.normal(k2, (HIDDEN, HIDDEN), jnp.float32) * jnp.sqrt(
        2.0 / (2 * HIDDEN))
    b2 = jnp.zeros((HIDDEN,), jnp.float32)
    # ad_layer3 (SLR): weight [1, hidden+1] xavier_uniform, bias zeros (forward-unused)
    a = jnp.sqrt(6.0 / (1 + HIDDEN + 1))
    w3 = jax.random.uniform(k3, (1, HIDDEN + 1), jnp.float32, minval=-a, maxval=a)

    y = adversarial_network_sp(x, w1, b1, w2, b2, w3)
    y = jax.block_until_ready(y)

    y_ref = _ref_forward(x, w1, b1, w2, b2, w3)

    assert y.shape == (B, 1) and y.dtype == jnp.float32
    assert bool(jnp.all(jnp.isfinite(y)))
    assert bool(jnp.allclose(y, y_ref, atol=3e-4, rtol=1e-3)), (y, y_ref)
    print("KERNEL_OK")
</pallas_src>

<mosaic_0001>
module attributes {stable_mosaic.version = 11 : i64} {
  func.func @adv_kernel(%arg0: i32, %arg1: memref<8x32xf32, #tpu.memory_space<vmem>>, %arg2: memref<33x32xf32, #tpu.memory_space<vmem>>, %arg3: memref<33x1xf32, #tpu.memory_space<vmem>>, %arg4: memref<33x33xf32, #tpu.memory_space<vmem>>, %arg5: memref<33x1xf32, #tpu.memory_space<vmem>>, %arg6: memref<1x33xf32, #tpu.memory_space<vmem>>, %arg7: memref<1x8xf32, #tpu.memory_space<vmem>>) attributes {dimension_semantics = [#tpu.dimension_semantics<parallel>], iteration_bounds = array<i64: 1>, scalar_prefetch = 0 : i64, scratch_operands = 0 : i64, tpu.core_type = #tpu.core_type<tc>, window_params = [{transform_indices = @transform_0, window_bounds = array<i64: 8, 32>}, {pipeline_mode = #tpu.pipeline_mode<synchronous>, transform_indices = @transform_1, window_bounds = array<i64: 33, 32>}, {pipeline_mode = #tpu.pipeline_mode<synchronous>, transform_indices = @transform_2, window_bounds = array<i64: 33, 1>}, {pipeline_mode = #tpu.pipeline_mode<synchronous>, transform_indices = @transform_3, window_bounds = array<i64: 33, 33>}, {pipeline_mode = #tpu.pipeline_mode<synchronous>, transform_indices = @transform_4, window_bounds = array<i64: 33, 1>}, {pipeline_mode = #tpu.pipeline_mode<synchronous>, transform_indices = @transform_5, window_bounds = array<i64: 1, 33>}, {transform_indices = @transform_6, window_bounds = array<i64: 1, 8>}]} {
    %0 = tpu.iota {dimensions = array<i32: 1>} : vector<1x32xi32>
    %c31_i32 = arith.constant 31 : i32
    %1 = vector.broadcast %c31_i32 : i32 to vector<1x32xi32>
    %2 = arith.cmpi eq, %0, %1 : vector<1x32xi32>
    %3 = arith.extui %2 : vector<1x32xi1> to vector<1x32xi32>
    %4 = arith.sitofp %3 : vector<1x32xi32> to vector<1x32xf32>
    %cst = arith.constant 1.000000e+00 : f32
    %5 = vector.broadcast %cst : f32 to vector<1x32xf32>
    %6 = arith.subf %5, %4 : vector<1x32xf32>
    %7 = tpu.iota {dimensions = array<i32: 1>} : vector<1x33xi32>
    %c32_i32 = arith.constant 32 : i32
    %8 = vector.broadcast %c32_i32 : i32 to vector<1x33xi32>
    %9 = arith.cmpi eq, %7, %8 : vector<1x33xi32>
    %10 = arith.extui %9 : vector<1x33xi1> to vector<1x33xi32>
    %11 = arith.sitofp %10 : vector<1x33xi32> to vector<1x33xf32>
    %cst_0 = arith.constant 1.000000e+00 : f32
    %12 = vector.broadcast %cst_0 : f32 to vector<1x33xf32>
    %13 = arith.subf %12, %11 : vector<1x33xf32>
    %14 = tpu.iota {dimensions = array<i32: 0>} : vector<33x1xi32>
    %c32_i32_1 = arith.constant 32 : i32
    %15 = vector.broadcast %c32_i32_1 : i32 to vector<33x1xi32>
    %16 = arith.cmpi eq, %14, %15 : vector<33x1xi32>
    %c0 = arith.constant 0 : index
    %c0_2 = arith.constant 0 : index
    %17 = vector.load %arg1[%c0, %c0_2] : memref<8x32xf32, #tpu.memory_space<vmem>>, vector<8x32xf32>
    %c0_3 = arith.constant 0 : index
    %c0_4 = arith.constant 0 : index
    %18 = vector.load %arg2[%c0_3, %c0_4] : memref<33x32xf32, #tpu.memory_space<vmem>>, vector<33x32xf32>
    %c0_5 = arith.constant 0 : index
    %c0_6 = arith.constant 0 : index
    %19 = vector.load %arg3[%c0_5, %c0_6] : memref<33x1xf32, #tpu.memory_space<vmem>>, vector<33x1xf32>
    %cst_7 = arith.constant dense<0.000000e+00> : vector<1x8xf32>
    %20 = tpu.matmul %4, %17, %cst_7 {dimension_numbers = #tpu.dot_dimension_numbers<[1], [1], [0], [0], [0, 0, 1, 0], [], []>} : vector<1x32xf32>, vector<8x32xf32>, vector<1x8xf32> -> vector<1x8xf32>
    %21 = arith.mulf %17, %17 : vector<8x32xf32>
    %cst_8 = arith.constant dense<0.000000e+00> : vector<1x8xf32>
    %22 = tpu.matmul %6, %21, %cst_8 {dimension_numbers = #tpu.dot_dimension_numbers<[1], [1], [0], [0], [0, 0, 1, 0], [], []>} : vector<1x32xf32>, vector<8x32xf32>, vector<1x8xf32> -> vector<1x8xf32>
    %23 = arith.mulf %20, %20 : vector<1x8xf32>
    %24 = arith.addf %22, %23 : vector<1x8xf32>
    %cst_9 = arith.constant 1.000000e-18 : f32
    %25 = vector.broadcast %cst_9 : f32 to vector<1x8xf32>
    %26 = arith.maximumf %24, %25 : vector<1x8xf32>
    %27 = math.rsqrt %26 : vector<1x8xf32>
    %28 = arith.mulf %20, %27 : vector<1x8xf32>
    %29 = math.absf %28 : vector<1x8xf32>
    %cst_10 = arith.constant 0.999899983 : f32
    %30 = vector.broadcast %cst_10 : f32 to vector<1x8xf32>
    %31 = arith.cmpf ogt, %29, %30 : vector<1x8xf32>
    %cst_11 = arith.constant 0.999899983 : f32
    %32 = vector.broadcast %cst_11 : f32 to vector<1x8xf32>
    %33 = arith.mulf %28, %32 : vector<1x8xf32>
    %34 = arith.select %31, %33, %28 : vector<1x8xi1>, vector<1x8xf32>
    %35 = arith.mulf %34, %34 : vector<1x8xf32>
    %cst_12 = arith.constant 1.000000e+00 : f32
    %36 = vector.broadcast %cst_12 : f32 to vector<1x8xf32>
    %37 = arith.subf %36, %35 : vector<1x8xf32>
    %cst_13 = arith.constant 0.000000e+00 : f32
    %38 = vector.broadcast %cst_13 : f32 to vector<1x8xf32>
    %39 = arith.maximumf %37, %38 : vector<1x8xf32>
    %40 = math.sqrt %39 : vector<1x8xf32>
    %41 = math.atan2 %40, %34 : vector<1x8xf32>
    %cst_14 = arith.constant 1.000000e+01 : f32
    %42 = vector.broadcast %cst_14 : f32 to vector<1x8xf32>
    %43 = arith.mulf %34, %42 : vector<1x8xf32>
    %44 = arith.subf %20, %43 : vector<1x8xf32>
    %45 = arith.mulf %44, %44 : vector<1x8xf32>
    %46 = arith.addf %22, %45 : vector<1x8xf32>
    %cst_15 = arith.constant 1.000000e-24 : f32
    %47 = vector.broadcast %cst_15 : f32 to vector<1x8xf32>
    %48 = arith.maximumf %46, %47 : vector<1x8xf32>
    %49 = math.rsqrt %48 : vector<1x8xf32>
    %cst_16 = arith.constant 1.000000e+01 : f32
    %50 = vector.broadcast %cst_16 : f32 to vector<1x8xf32>
    %51 = arith.mulf %50, %41 : vector<1x8xf32>
    %52 = arith.mulf %51, %49 : vector<1x8xf32>
    %cst_17 = arith.constant dense<0.000000e+00> : vector<33x8xf32>
    %53 = tpu.matmul %18, %17, %cst_17 {dimension_numbers = #tpu.dot_dimension_numbers<[1], [1], [0], [0], [0, 0, 1, 0], [], []>} : vector<33x32xf32>, vector<8x32xf32>, vector<33x8xf32> -> vector<33x8xf32>
    %54 = vector.broadcast %52 : vector<1x8xf32> to vector<33x8xf32>
    %55 = arith.mulf %54, %53 : vector<33x8xf32>
    %56 = vector.broadcast %19 : vector<33x1xf32> to vector<33x8xf32>
    %57 = arith.addf %55, %56 : vector<33x8xf32>
    %58 = arith.mulf %57, %57 : vector<33x8xf32>
    %cst_18 = arith.constant dense<0.000000e+00> : vector<8xf32>
    %59 = vector.multi_reduction <add>, %58, %cst_18 [0] : vector<33x8xf32> to vector<8xf32>
    %60 = vector.shape_cast %59 : vector<8xf32> to vector<1x8xf32>
    %cst_19 = arith.constant 1.000000e-24 : f32
    %61 = vector.broadcast %cst_19 : f32 to vector<1x8xf32>
    %62 = arith.maximumf %60, %61 : vector<1x8xf32>
    %63 = math.rsqrt %62 : vector<1x8xf32>
    %64 = arith.mulf %60, %63 : vector<1x8xf32>
    %cst_20 = arith.constant 1.000000e-01 : f32
    %65 = vector.broadcast %cst_20 : f32 to vector<1x8xf32>
    %66 = arith.mulf %64, %65 : vector<1x8xf32>
    %67 = math.sin %66 : vector<1x8xf32>
    %68 = math.cos %66 : vector<1x8xf32>
    %cst_21 = arith.constant 1.000000e+01 : f32
    %69 = vector.broadcast %cst_21 : f32 to vector<1x8xf32>
    %70 = arith.mulf %68, %69 : vector<1x8xf32>
    %cst_22 = arith.constant 1.000000e+01 : f32
    %71 = vector.broadcast %cst_22 : f32 to vector<1x8xf32>
    %72 = arith.mulf %67, %71 : vector<1x8xf32>
    %73 = vector.broadcast %63 : vector<1x8xf32> to vector<33x8xf32>
    %74 = arith.mulf %57, %73 : vector<33x8xf32>
    %75 = vector.broadcast %72 : vector<1x8xf32> to vector<33x8xf32>
    %76 = arith.mulf %75, %74 : vector<33x8xf32>
    %77 = vector.shape_cast %16 : vector<33x1xi1> to vector<33x1xi1>
    %78 = vector.broadcast %77 : vector<33x1xi1> to vector<33x8xi1>
    %79 = vector.shape_cast %70 : vector<1x8xf32> to vector<1x8xf32>
    %80 = vector.broadcast %79 : vector<1x8xf32> to vector<33x8xf32>
    %81 = arith.select %78, %80, %76 : vector<33x8xi1>, vector<33x8xf32>
    %cst_23 = arith.constant 0.000000e+00 : f32
    %82 = vector.broadcast %cst_23 : f32 to vector<33x8xf32>
    %83 = arith.maximumf %81, %82 : vector<33x8xf32>
    %84 = arith.mulf %83, %83 : vector<33x8xf32>
    %cst_24 = arith.constant dense<0.000000e+00> : vector<8xf32>
    %85 = vector.multi_reduction <add>, %84, %cst_24 [0] : vector<33x8xf32> to vector<8xf32>
    %86 = vector.shape_cast %85 : vector<8xf32> to vector<1x8xf32>
    %cst_25 = arith.constant 1.000000e+01 : f32
    %87 = vector.broadcast %cst_25 : f32 to vector<33x8xf32>
    %88 = arith.mulf %87, %83 : vector<33x8xf32>
    %cst_26 = arith.constant 1.000000e-24 : f32
    %89 = vector.broadcast %cst_26 : f32 to vector<1x8xf32>
    %90 = arith.maximumf %86, %89 : vector<1x8xf32>
    %91 = math.rsqrt %90 : vector<1x8xf32>
    %92 = vector.broadcast %91 : vector<1x8xf32> to vector<33x8xf32>
    %93 = arith.mulf %88, %92 : vector<33x8xf32>
    %c0_27 = arith.constant 0 : index
    %c0_28 = arith.constant 0 : index
    %94 = vector.load %arg4[%c0_27, %c0_28] : memref<33x33xf32, #tpu.memory_space<vmem>>, vector<33x33xf32>
    %c0_29 = arith.constant 0 : index
    %c0_30 = arith.constant 0 : index
    %95 = vector.load %arg5[%c0_29, %c0_30] : memref<33x1xf32, #tpu.memory_space<vmem>>, vector<33x1xf32>
    %cst_31 = arith.constant dense<0.000000e+00> : vector<1x8xf32>
    %96 = tpu.matmul %11, %93, %cst_31 {dimension_numbers = #tpu.dot_dimension_numbers<[1], [0], [0], [1], [0, 0, 1, 1], [], []>} : vector<1x33xf32>, vector<33x8xf32>, vector<1x8xf32> -> vector<1x8xf32>
    %97 = arith.mulf %93, %93 : vector<33x8xf32>
    %cst_32 = arith.constant dense<0.000000e+00> : vector<1x8xf32>
    %98 = tpu.matmul %13, %97, %cst_32 {dimension_numbers = #tpu.dot_dimension_numbers<[1], [0], [0], [1], [0, 0, 1, 1], [], []>} : vector<1x33xf32>, vector<33x8xf32>, vector<1x8xf32> -> vector<1x8xf32>
    %99 = arith.mulf %96, %96 : vector<1x8xf32>
    %100 = arith.addf %98, %99 : vector<1x8xf32>
    %cst_33 = arith.constant 1.000000e-18 : f32
    %101 = vector.broadcast %cst_33 : f32 to vector<1x8xf32>
    %102 = arith.maximumf %100, %101 : vector<1x8xf32>
    %103 = math.rsqrt %102 : vector<1x8xf32>
    %104 = arith.mulf %96, %103 : vector<1x8xf32>
    %105 = math.absf %104 : vector<1x8xf32>
    %cst_34 = arith.constant 0.999899983 : f32
    %106 = vector.broadcast %cst_34 : f32 to vector<1x8xf32>
    %107 = arith.cmpf ogt, %105, %106 : vector<1x8xf32>
    %cst_35 = arith.constant 0.999899983 : f32
    %108 = vector.broadcast %cst_35 : f32 to vector<1x8xf32>
    %109 = arith.mulf %104, %108 : vector<1x8xf32>
    %110 = arith.select %107, %109, %104 : vector<1x8xi1>, vector<1x8xf32>
    %111 = arith.mulf %110, %110 : vector<1x8xf32>
    %cst_36 = arith.constant 1.000000e+00 : f32
    %112 = vector.broadcast %cst_36 : f32 to vector<1x8xf32>
    %113 = arith.subf %112, %111 : vector<1x8xf32>
    %cst_37 = arith.constant 0.000000e+00 : f32
    %114 = vector.broadcast %cst_37 : f32 to vector<1x8xf32>
    %115 = arith.maximumf %113, %114 : vector<1x8xf32>
    %116 = math.sqrt %115 : vector<1x8xf32>
    %117 = math.atan2 %116, %110 : vector<1x8xf32>
    %cst_38 = arith.constant 1.000000e+01 : f32
    %118 = vector.broadcast %cst_38 : f32 to vector<1x8xf32>
    %119 = arith.mulf %110, %118 : vector<1x8xf32>
    %120 = arith.subf %96, %119 : vector<1x8xf32>
    %121 = arith.mulf %120, %120 : vector<1x8xf32>
    %122 = arith.addf %98, %121 : vector<1x8xf32>
    %cst_39 = arith.constant 1.000000e-24 : f32
    %123 = vector.broadcast %cst_39 : f32 to vector<1x8xf32>
    %124 = arith.maximumf %122, %123 : vector<1x8xf32>
    %125 = math.rsqrt %124 : vector<1x8xf32>
    %cst_40 = arith.constant 1.000000e+01 : f32
    %126 = vector.broadcast %cst_40 : f32 to vector<1x8xf32>
    %127 = arith.mulf %126, %117 : vector<1x8xf32>
    %128 = arith.mulf %127, %125 : vector<1x8xf32>
    %cst_41 = arith.constant dense<0.000000e+00> : vector<33x8xf32>
    %129 = tpu.matmul %94, %93, %cst_41 {dimension_numbers = #tpu.dot_dimension_numbers<[1], [0], [0], [1], [0, 0, 1, 1], [], []>} : vector<33x33xf32>, vector<33x8xf32>, vector<33x8xf32> -> vector<33x8xf32>
    %130 = vector.broadcast %128 : vector<1x8xf32> to vector<33x8xf32>
    %131 = arith.mulf %130, %129 : vector<33x8xf32>
    %132 = vector.broadcast %95 : vector<33x1xf32> to vector<33x8xf32>
    %133 = arith.addf %131, %132 : vector<33x8xf32>
    %134 = arith.mulf %133, %133 : vector<33x8xf32>
    %cst_42 = arith.constant dense<0.000000e+00> : vector<8xf32>
    %135 = vector.multi_reduction <add>, %134, %cst_42 [0] : vector<33x8xf32> to vector<8xf32>
    %136 = vector.shape_cast %135 : vector<8xf32> to vector<1x8xf32>
    %cst_43 = arith.constant 1.000000e-24 : f32
    %137 = vector.broadcast %cst_43 : f32 to vector<1x8xf32>
    %138 = arith.maximumf %136, %137 : vector<1x8xf32>
    %139 = math.rsqrt %138 : vector<1x8xf32>
    %140 = arith.mulf %136, %139 : vector<1x8xf32>
    %cst_44 = arith.constant 1.000000e-01 : f32
    %141 = vector.broadcast %cst_44 : f32 to vector<1x8xf32>
    %142 = arith.mulf %140, %141 : vector<1x8xf32>
    %143 = math.sin %142 : vector<1x8xf32>
    %144 = math.cos %142 : vector<1x8xf32>
    %cst_45 = arith.constant 1.000000e+01 : f32
    %145 = vector.broadcast %cst_45 : f32 to vector<1x8xf32>
    %146 = arith.mulf %144, %145 : vector<1x8xf32>
    %cst_46 = arith.constant 1.000000e+01 : f32
    %147 = vector.broadcast %cst_46 : f32 to vector<1x8xf32>
    %148 = arith.mulf %143, %147 : vector<1x8xf32>
    %149 = vector.broadcast %139 : vector<1x8xf32> to vector<33x8xf32>
    %150 = arith.mulf %133, %149 : vector<33x8xf32>
    %151 = vector.broadcast %148 : vector<1x8xf32> to vector<33x8xf32>
    %152 = arith.mulf %151, %150 : vector<33x8xf32>
    %153 = vector.shape_cast %16 : vector<33x1xi1> to vector<33x1xi1>
    %154 = vector.broadcast %153 : vector<33x1xi1> to vector<33x8xi1>
    %155 = vector.shape_cast %146 : vector<1x8xf32> to vector<1x8xf32>
    %156 = vector.broadcast %155 : vector<1x8xf32> to vector<33x8xf32>
    %157 = arith.select %154, %156, %152 : vector<33x8xi1>, vector<33x8xf32>
    %cst_47 = arith.constant 0.000000e+00 : f32
    %158 = vector.broadcast %cst_47 : f32 to vector<33x8xf32>
    %159 = arith.maximumf %157, %158 : vector<33x8xf32>
    %160 = arith.mulf %159, %159 : vector<33x8xf32>
    %cst_48 = arith.constant dense<0.000000e+00> : vector<8xf32>
    %161 = vector.multi_reduction <add>, %160, %cst_48 [0] : vector<33x8xf32> to vector<8xf32>
    %162 = vector.shape_cast %161 : vector<8xf32> to vector<1x8xf32>
    %cst_49 = arith.constant 1.000000e+01 : f32
    %163 = vector.broadcast %cst_49 : f32 to vector<33x8xf32>
    %164 = arith.mulf %163, %159 : vector<33x8xf32>
    %cst_50 = arith.constant 1.000000e-24 : f32
    %165 = vector.broadcast %cst_50 : f32 to vector<1x8xf32>
    %166 = arith.maximumf %162, %165 : vector<1x8xf32>
    %167 = math.rsqrt %166 : vector<1x8xf32>
    %168 = vector.broadcast %167 : vector<1x8xf32> to vector<33x8xf32>
    %169 = arith.mulf %164, %168 : vector<33x8xf32>
    %c0_51 = arith.constant 0 : index
    %c0_52 = arith.constant 0 : index
    %170 = vector.load %arg6[%c0_51, %c0_52] : memref<1x33xf32, #tpu.memory_space<vmem>>, vector<1x33xf32>
    %cst_53 = arith.constant dense<0.000000e+00> : vector<1x8xf32>
    %171 = tpu.matmul %170, %169, %cst_53 {dimension_numbers = #tpu.dot_dimension_numbers<[1], [0], [0], [1], [0, 0, 1, 1], [], []>} : vector<1x33xf32>, vector<33x8xf32>, vector<1x8xf32> -> vector<1x8xf32>
    %cst_54 = arith.constant 5.000000e-01 : f32
    %172 = vector.broadcast %cst_54 : f32 to vector<1x8xf32>
    %173 = arith.mulf %172, %171 : vector<1x8xf32>
    %174 = math.tanh %173 : vector<1x8xf32>
    %cst_55 = arith.constant 1.000000e+00 : f32
    %175 = vector.broadcast %cst_55 : f32 to vector<1x8xf32>
    %176 = arith.addf %174, %175 : vector<1x8xf32>
    %cst_56 = arith.constant 5.000000e-01 : f32
    %177 = vector.broadcast %cst_56 : f32 to vector<1x8xf32>
    %178 = arith.mulf %177, %176 : vector<1x8xf32>
    %c0_57 = arith.constant 0 : index
    %c0_58 = arith.constant 0 : index
    %179 = vector.load %arg7[%c0_57, %c0_58] : memref<1x8xf32, #tpu.memory_space<vmem>>, vector<1x8xf32>
    tpu.vector_store %arg7[%c0_57, %c0_58], %178 {strides = array<i32>} : memref<1x8xf32, #tpu.memory_space<vmem>>, vector<1x8xf32>,
    return
  }
  func.func @transform_0(%arg0: i32) -> (i32, i32) {
    %c0_i32 = arith.constant 0 : i32
    %c0_i32_0 = arith.constant 0 : i32
    return %arg0, %c0_i32 : i32, i32
  }
  func.func @transform_1(%arg0: i32) -> (i32, i32) {
    %c0_i32 = arith.constant 0 : i32
    %c0_i32_0 = arith.constant 0 : i32
    %c0_i32_1 = arith.constant 0 : i32
    return %c0_i32, %c0_i32_0 : i32, i32
  }
  func.func @transform_2(%arg0: i32) -> (i32, i32) {
    %c0_i32 = arith.constant 0 : i32
    %c0_i32_0 = arith.constant 0 : i32
    %c0_i32_1 = arith.constant 0 : i32
    return %c0_i32, %c0_i32_0 : i32, i32
  }
  func.func @transform_3(%arg0: i32) -> (i32, i32) {
    %c0_i32 = arith.constant 0 : i32
    %c0_i32_0 = arith.constant 0 : i32
    %c0_i32_1 = arith.constant 0 : i32
    return %c0_i32, %c0_i32_0 : i32, i32
  }
  func.func @transform_4(%arg0: i32) -> (i32, i32) {
    %c0_i32 = arith.constant 0 : i32
    %c0_i32_0 = arith.constant 0 : i32
    %c0_i32_1 = arith.constant 0 : i32
    return %c0_i32, %c0_i32_0 : i32, i32
  }
  func.func @transform_5(%arg0: i32) -> (i32, i32) {
    %c0_i32 = arith.constant 0 : i32
    %c0_i32_0 = arith.constant 0 : i32
    %c0_i32_1 = arith.constant 0 : i32
    return %c0_i32, %c0_i32_0 : i32, i32
  }
  func.func @transform_6(%arg0: i32) -> (i32, i32) {
    %c0_i32 = arith.constant 0 : i32
    %c0_i32_0 = arith.constant 0 : i32
    return %c0_i32, %arg0 : i32, i32
  }
}

</mosaic_0001>

<llo_original>
// kernel: tpu_custom_call.1
$region0: #{tpu_custom_call.1}
  #allocation0 [shape = 'u32[]', space=smem, size = 0x4, offset = 0x4, fixed_abs, tag = 'smem constant byte address 0x4 - core index']
  #allocation1 [shape = 'u32[144,128]{1,0:T(1,128)}', space=vmem, size = 0x12000, scoped, tag = 'internal scratch']
  %s0 = inlined_call_operand.vmem [shape: f32[8,32], index: 0, kind: input, shape index: {}]
  %s1 = inlined_call_operand.vmem [shape: f32[33,32], index: 1, kind: input, shape index: {}]
  %s2 = inlined_call_operand.vmem [shape: f32[33,1], index: 2, kind: input, shape index: {}]
  %s3 = inlined_call_operand.vmem [shape: f32[33,33], index: 3, kind: input, shape index: {}]
  %s4 = inlined_call_operand.vmem [shape: f32[33,1], index: 4, kind: input, shape index: {}]
  %s5 = inlined_call_operand.vmem [shape: f32[1,33], index: 5, kind: input, shape index: {}]
  %s6 = inlined_call_operand.hbm [shape: f32[1,8], index: 6, kind: output, shape index: {}]
  %s7 = sld [smem:[#allocation0]]
  $region34: #{tpu_custom_call.1} parent=0
    _
  %s9 = ssub.s32 1, %s7
  %s10 = scalar_select 0, %s9, %s7
  $region1: #{tpu_custom_call.1} parent=0
    #allocation2 [shape = 'u8[512]{0}', space=vmem, size = 0x400, scoped, tag = 'output window, operand 0, single buffered']
    #allocation3 [shape = 's32[1]{0}', space=sflag, size = 0x4, scoped, tag = 'scoped memory for tpu_custom_call.1']
    %11 = vsyncpa [#allocation3], 0
    // Predicated region
    $region2: #{tpu_custom_call.1} parent=1 // pred_check
      _
    $region3: #{tpu_custom_call.1} parent=1 // pred_check_branch
      %13 = sbr.rel (0) target = $region5
    $region4: #{tpu_custom_call.1} parent=1 // pred_region
      _
    $region5: #{tpu_custom_call.1} parent=1 // pred_fallthru
      _
    // Predicated region
    $region6: #{tpu_custom_call.1} parent=1 // pred_check
      _
    $region7: #{tpu_custom_call.1} parent=1 // pred_check_branch
      %15 = sbr.rel (0) target = $region9
    $region8: #{tpu_custom_call.1} parent=1 // pred_region
      _
    $region9: #{tpu_custom_call.1} parent=1 // pred_fallthru
      _
    // Predicated region
    $region10: #{tpu_custom_call.1} parent=1 // pred_check
      _
    $region11: #{tpu_custom_call.1} parent=1 // pred_check_branch
      %17 = sbr.rel (0) target = $region13
    $region12: #{tpu_custom_call.1} parent=1 // pred_region
      _
    $region13: #{tpu_custom_call.1} parent=1 // pred_fallthru
      _
    // Predicated region
    $region14: #{tpu_custom_call.1} parent=1 // pred_check
      _
    $region15: #{tpu_custom_call.1} parent=1 // pred_check_branch
      %19 = sbr.rel (0) target = $region17
    $region16: #{tpu_custom_call.1} parent=1 // pred_region
      _
    $region17: #{tpu_custom_call.1} parent=1 // pred_fallthru
      _
    // Predicated region
    $region18: #{tpu_custom_call.1} parent=1 // pred_check
      _
    $region19: #{tpu_custom_call.1} parent=1 // pred_check_branch
      %21 = sbr.rel (0) target = $region21
    $region20: #{tpu_custom_call.1} parent=1 // pred_region
      _
    $region21: #{tpu_custom_call.1} parent=1 // pred_fallthru
      _
    // Predicated region
    $region22: #{tpu_custom_call.1} parent=1 // pred_check
      _
    $region23: #{tpu_custom_call.1} parent=1 // pred_check_branch
      %23 = sbr.rel (0) target = $region25
    $region24: #{tpu_custom_call.1} parent=1 // pred_region
      _
    $region25: #{tpu_custom_call.1} parent=1 // pred_fallthru
      _
    %v24 = vlaneseq
    %v25 = vand.u32 %v24, 127
    %vm26 = vcmp.eq.s32.totalorder %v25, 31
    %v27 = vsel %vm26, 1, 0
    %v28 = vcvt.s32.f32 %v27
    %v29 = vsub.f32 1.0, %v28
    %vm30 = vcmp.eq.s32.totalorder %v25, 32
    %v31 = vsel %vm30, 1, 0
    %v32 = vcvt.s32.f32 %v31
    %v33 = vsub.f32 1.0, %v32
    %v34 = vlaneseq
    %v35 = vshrl.u32 %v34, 7
    %v36 = vadd.s32 %v35, 8
    %v37 = vadd.s32 %v35, 16
    %v38 = vadd.s32 %v35, 24
    %v39 = vadd.s32 %v35, 32
    %vm40 = vcmp.eq.s32.totalorder %v35, 32
    %vm41 = vcmp.eq.s32.totalorder %v36, 32
    %vm42 = vcmp.eq.s32.totalorder %v37, 32
    %vm43 = vcmp.eq.s32.totalorder %v38, 32
    %vm44 = vcmp.eq.s32.totalorder %v39, 32
    %v45 = vld [vmem:[%s0] sm:$0xff]
    %v46 = vld [vmem:[%s1] sm:$0xff]
    %v47 = vld [vmem:[%s1 + $0x8] sm:$0xff]
    %v48 = vld [vmem:[%s1 + $0x10] sm:$0xff]
    %v49 = vld [vmem:[%s1 + $0x18] sm:$0xff]
    %v50 = vld [vmem:[%s1 + $0x20] sm:$0x1]
    %v51 = vld [vmem:[%s2] sm:$0xff]
    %v52 = vld [vmem:[%s2 + $0x8] sm:$0xff]
    %v53 = vld [vmem:[%s2 + $0x10] sm:$0xff]
    %v54 = vld [vmem:[%s2 + $0x18] sm:$0xff]
    %v55 = vld [vmem:[%s2 + $0x20] sm:$0x1]
    %vm56 = vcmask 261120
    %v58 = vsel %vm56, %v28, 0
    %v61 = vsel %vm56, %v45, 0
    %63 = vmatprep.subr.mxu0 0.0
    %64 = vmatpush1.xpose.msra.mxu0 %v61
    %65 = vmatprep.subr.mxu0 0.0
    %66 = vmatpush1.xpose.msra.mxu0 0.0
    %67 = vmatprep.subr.mxu0 0.0
    %68 = vmatpush1.xpose.msra.mxu0 0.0
    %69 = vmatprep.subr.mxu0 0.0
    %70 = vmatpush1.xpose.msra.mxu0 0.0
    %71 = vmatprep.subr.mxu0 0.0
    %72 = vmatpush1.xpose.msra.mxu0 0.0
    %73 = vmatprep.subr.mxu0 0.0
    %74 = vmatpush1.xpose.msra.mxu0 0.0
    %75 = vmatprep.subr.mxu0 0.0
    %76 = vmatpush1.xpose.msra.mxu0 0.0
    %77 = vmatprep.subr.mxu0 0.0
    %78 = vmatpush1.xpose.msra.mxu0 0.0
    %79 = vmatprep.subr.mxu0 0.0
    %80 = vmatpush1.xpose.msra.mxu0 0.0
    %81 = vmatprep.subr.mxu0 0.0
    %82 = vmatpush1.xpose.msra.mxu0 0.0
    %83 = vmatprep.subr.mxu0 0.0
    %84 = vmatpush1.xpose.msra.mxu0 0.0
    %85 = vmatprep.subr.mxu0 0.0
    %86 = vmatpush1.xpose.msra.mxu0 0.0
    %87 = vmatprep.subr.mxu0 0.0
    %88 = vmatpush1.xpose.msra.mxu0 0.0
    %89 = vmatprep.subr.mxu0 0.0
    %90 = vmatpush1.xpose.msra.mxu0 0.0
    %91 = vmatprep.subr.mxu0 0.0
    %92 = vmatpush1.xpose.msra.mxu0 0.0
    %93 = vmatprep.subr.mxu0 0.0
    %94 = vmatpush1.xpose.msra.mxu0 0.0
    %95 = vmatprep.subr.mxu0 0.0
    %96 = vmatpush1.xpose.msra.mxu0 0.0
    %97 = vmatprep.subr.mxu0 0.0
    %98 = vmatpush1.xpose.msra.mxu0 0.0
    %99 = vmatprep.subr.mxu0 0.0
    %100 = vmatpush1.xpose.msra.mxu0 0.0
    %101 = vmatprep.subr.mxu0 0.0
    %102 = vmatpush1.xpose.msra.mxu0 0.0
    %103 = vmatprep.subr.mxu0 0.0
    %104 = vmatpush1.xpose.msra.mxu0 0.0
    %105 = vmatprep.subr.mxu0 0.0
    %106 = vmatpush1.xpose.msra.mxu0 0.0
    %107 = vmatprep.subr.mxu0 0.0
    %108 = vmatpush1.xpose.msra.mxu0 0.0
    %109 = vmatprep.subr.mxu0 0.0
    %110 = vmatpush1.xpose.msra.mxu0 0.0
    %111 = vmatprep.subr.mxu0 0.0
    %112 = vmatpush1.xpose.msra.mxu0 0.0
    %113 = vmatprep.subr.mxu0 0.0
    %114 = vmatpush1.xpose.msra.mxu0 0.0
    %115 = vmatprep.subr.mxu0 0.0
    %116 = vmatpush1.xpose.msra.mxu0 0.0
    %117 = vmatprep.subr.mxu0 0.0
    %118 = vmatpush1.xpose.msra.mxu0 0.0
    %119 = vmatprep.subr.mxu0 0.0
    %120 = vmatpush1.xpose.msra.mxu0 0.0
    %121 = vmatprep.subr.mxu0 0.0
    %122 = vmatpush1.xpose.msra.mxu0 0.0
    %123 = vmatprep.subr.mxu0 0.0
    %124 = vmatpush1.xpose.msra.mxu0 0.0
    %125 = vmatprep.subr.mxu0 0.0
    %126 = vmatpush1.xpose.msra.mxu0 0.0
    %127 = vmatprep.mubr.f32.mxu0 0.0
    %128 = vmatmul.mubr.f32.gmra.mrb[0].mxu0 %v58
    %v129 = vpop.f32.mrb[0].mxu0
    %v130 = vadd.f32 0.0, %v129
    %v131 = vpop.f32.mrb[0].mxu0
    %132 = vdwg.mxu0
    %v133 = vmul.f32 %v45, %v45
    %v135 = vsel %vm56, %v29, 0
    %v138 = vsel %vm56, %v133, 0
    %140 = vmatprep.subr.mxu0 0.0
    %141 = vmatpush1.xpose.msra.mxu0 %v138
    %142 = vmatprep.subr.mxu0 0.0
    %143 = vmatpush1.xpose.msra.mxu0 0.0
    %144 = vmatprep.subr.mxu0 0.0
    %145 = vmatpush1.xpose.msra.mxu0 0.0
    %146 = vmatprep.subr.mxu0 0.0
    %147 = vmatpush1.xpose.msra.mxu0 0.0
    %148 = vmatprep.subr.mxu0 0.0
    %149 = vmatpush1.xpose.msra.mxu0 0.0
    %150 = vmatprep.subr.mxu0 0.0
    %151 = vmatpush1.xpose.msra.mxu0 0.0
    %152 = vmatprep.subr.mxu0 0.0
    %153 = vmatpush1.xpose.msra.mxu0 0.0
    %154 = vmatprep.subr.mxu0 0.0
    %155 = vmatpush1.xpose.msra.mxu0 0.0
    %156 = vmatprep.subr.mxu0 0.0
    %157 = vmatpush1.xpose.msra.mxu0 0.0
    %158 = vmatprep.subr.mxu0 0.0
    %159 = vmatpush1.xpose.msra.mxu0 0.0
    %160 = vmatprep.subr.mxu0 0.0
    %161 = vmatpush1.xpose.msra.mxu0 0.0
    %162 = vmatprep.subr.mxu0 0.0
    %163 = vmatpush1.xpose.msra.mxu0 0.0
    %164 = vmatprep.subr.mxu0 0.0
    %165 = vmatpush1.xpose.msra.mxu0 0.0
    %166 = vmatprep.subr.mxu0 0.0
    %167 = vmatpush1.xpose.msra.mxu0 0.0
    %168 = vmatprep.subr.mxu0 0.0
    %169 = vmatpush1.xpose.msra.mxu0 0.0
    %170 = vmatprep.subr.mxu0 0.0
    %171 = vmatpush1.xpose.msra.mxu0 0.0
    %172 = vmatprep.subr.mxu0 0.0
    %173 = vmatpush1.xpose.msra.mxu0 0.0
    %174 = vmatprep.subr.mxu0 0.0
    %175 = vmatpush1.xpose.msra.mxu0 0.0
    %176 = vmatprep.subr.mxu0 0.0
    %177 = vmatpush1.xpose.msra.mxu0 0.0
    %178 = vmatprep.subr.mxu0 0.0
    %179 = vmatpush1.xpose.msra.mxu0 0.0
    %180 = vmatprep.subr.mxu0 0.0
    %181 = vmatpush1.xpose.msra.mxu0 0.0
    %182 = vmatprep.subr.mxu0 0.0
    %183 = vmatpush1.xpose.msra.mxu0 0.0
    %184 = vmatprep.subr.mxu0 0.0
    %185 = vmatpush1.xpose.msra.mxu0 0.0
    %186 = vmatprep.subr.mxu0 0.0
    %187 = vmatpush1.xpose.msra.mxu0 0.0
    %188 = vmatprep.subr.mxu0 0.0
    %189 = vmatpush1.xpose.msra.mxu0 0.0
    %190 = vmatprep.subr.mxu0 0.0
    %191 = vmatpush1.xpose.msra.mxu0 0.0
    %192 = vmatprep.subr.mxu0 0.0
    %193 = vmatpush1.xpose.msra.mxu0 0.0
    %194 = vmatprep.subr.mxu0 0.0
    %195 = vmatpush1.xpose.msra.mxu0 0.0
    %196 = vmatprep.subr.mxu0 0.0
    %197 = vmatpush1.xpose.msra.mxu0 0.0
    %198 = vmatprep.subr.mxu0 0.0
    %199 = vmatpush1.xpose.msra.mxu0 0.0
    %200 = vmatprep.subr.mxu0 0.0
    %201 = vmatpush1.xpose.msra.mxu0 0.0
    %202 = vmatprep.subr.mxu0 0.0
    %203 = vmatpush1.xpose.msra.mxu0 0.0
    %204 = vmatprep.mubr.f32.mxu0 0.0
    %205 = vmatmul.mubr.f32.gmra.mrb[0].mxu0 %v135
    %v206 = vpop.f32.mrb[0].mxu0
    %v207 = vadd.f32 0.0, %v206
    %v208 = vpop.f32.mrb[0].mxu0
    %209 = vdwg.mxu0
    %v210 = vmul.f32 %v130, %v130
    %v211 = vadd.f32 %v207, %v210
    %v212 = vmax.f32 %v211, 1e-18
    %v213 = vrsqrt.pop %v212
    %v214 = vmul.f32 %v130, %v213
    %v215 = vand.u32 2147483647, %v214
    %vm216 = vcmp.gt.f32.partialorder %v215, 0.9999
    %v217 = vmul.f32 %v214, 0.9999
    %v218 = vsel %vm216, %v217, %v214
    %v219 = vmul.f32 %v218, %v218
    %v220 = vsub.f32 1.0, %v219
    %v221 = vmax.f32 %v220, 0.0
    %v222 = vrsqrt.pop %v221
    %v223 = vmul.f32 %v221, %v222
    %vm224 = vcmp.eq.f32.partialorder %v221, inf
    %v225 = vsel %vm224, %v221, %v223
    %vm226 = vcmp.eq.f32.partialorder %v221, 0.0
    %v227 = vand.u32 %v221, 2147483648
    %v228 = vsel %vm226, %v227, %v225
    %v229 = vand.u32 2147483647, %v218
    %v230 = vand.u32 2147483647, %v228
    %v231 = vmin.f32 %v229, %v230
    %v232 = vmax.f32 %v229, %v230
    %v233 = vrcp.pop %v232
    %v234 = vmul.f32 %v231, %v233
    %v235 = vmul.f32 %v234, %v234
    %v236 = vmul.f32 0.002785687, %v235
    %v237 = vadd.f32 %v236, -0.015866
    %v238 = vmul.f32 %v237, %v235
    %v239 = vadd.f32 %v238, 0.04247222
    %v240 = vmul.f32 %v239, %v235
    %v241 = vadd.f32 %v240, -0.074975304
    %v242 = vmul.f32 %v241, %v235
    %v243 = vadd.f32 %v242, 0.1064488
    %v244 = vmul.f32 %v243, %v235
    %v245 = vadd.f32 %v244, -0.14207031
    %v246 = vmul.f32 %v245, %v235
    %v247 = vadd.f32 %v246, 0.19993454
    %v248 = vmul.f32 %v247, %v235
    %v249 = vadd.f32 %v248, -0.33333147
    %v250 = vmul.f32 %v249, %v235
    %v251 = vmul.f32 %v250, %v234
    %v252 = vadd.f32 %v251, %v234
    %vm253 = vcmp.gt.f32.partialorder %v230, %v229
    %v254 = vsub.f32 1.5707964, %v252
    %v255 = vsel %vm253, %v254, %v252
    %vm256 = vcmp.lt.f32.partialorder %v218, 0.0
    %v257 = vsub.f32 3.1415927, %v255
    %v258 = vsel %vm256, %v257, %v255
    %vm259 = vcmp.lt.s32.totalorder %v218, 0
    %v260 = vsel %vm259, 3.1415927, 0.0
    %vm261 = vcmp.eq.f32.partialorder %v228, 0.0
    %v262 = vsel %vm261, %v260, %v258
    %vm263 = vcmp.ne.f32.partialorder %v218, %v218
    %vm264 = vcmp.ne.f32.partialorder %v228, %v228
    %vm265 = vmor %vm263, %vm264
    %v266 = vsel %vm265, nan, %v262
    %vm267 = vcmp.lt.f32.partialorder %v218, 0.0
    %v268 = vsel %vm267, 2.3561945, 0.7853982
    %vm269 = vcmp.eq.s32.totalorder %v229, inf
    %vm270 = vcmp.eq.s32.totalorder %v230, inf
    %vm271 = vmand %vm269, %vm270
    %v272 = vsel %vm271, %v268, %v266
    %v273 = vand.u32 2147483647, %v272
    %v274 = vand.u32 %v228, 2147483648
    %v275 = vor.u32 %v273, %v274
    %v276 = vmul.f32 %v218, 10.0
    %v277 = vsub.f32 %v130, %v276
    %v278 = vmul.f32 %v277, %v277
    %v279 = vadd.f32 %v207, %v278
    %v280 = vmax.f32 %v279, 1e-24
    %v281 = vrsqrt.pop %v280
    %v282 = vmul.f32 %v275, 10.0
    %v283 = vmul.f32 %v282, %v281
    %v285 = vsel %vm56, %v46, 0
    %v288 = vsel %vm56, %v47, 0
    %v291 = vsel %vm56, %v48, 0
    %v294 = vsel %vm56, %v49, 0
    %v297 = vsel %vm56, %v50, 0
    %299 = vmatprep.subr.mxu0 0.0
    %300 = vmatpush1.xpose.msra.mxu0 %v61
    %301 = vmatprep.subr.mxu0 0.0
    %302 = vmatpush1.xpose.msra.mxu0 0.0
    %303 = vmatprep.subr.mxu0 0.0
    %304 = vmatpush1.xpose.msra.mxu0 0.0
    %305 = vmatprep.subr.mxu0 0.0
    %306 = vmatpush1.xpose.msra.mxu0 0.0
    %307 = vmatprep.subr.mxu0 0.0
    %308 = vmatpush1.xpose.msra.mxu0 0.0
    %309 = vmatprep.subr.mxu0 0.0
    %310 = vmatpush1.xpose.msra.mxu0 0.0
    %311 = vmatprep.subr.mxu0 0.0
    %312 = vmatpush1.xpose.msra.mxu0 0.0
    %313 = vmatprep.subr.mxu0 0.0
    %314 = vmatpush1.xpose.msra.mxu0 0.0
    %315 = vmatprep.subr.mxu0 0.0
    %316 = vmatpush1.xpose.msra.mxu0 0.0
    %317 = vmatprep.subr.mxu0 0.0
    %318 = vmatpush1.xpose.msra.mxu0 0.0
    %319 = vmatprep.subr.mxu0 0.0
    %320 = vmatpush1.xpose.msra.mxu0 0.0
    %321 = vmatprep.subr.mxu0 0.0
    %322 = vmatpush1.xpose.msra.mxu0 0.0
    %323 = vmatprep.subr.mxu0 0.0
    %324 = vmatpush1.xpose.msra.mxu0 0.0
    %325 = vmatprep.subr.mxu0 0.0
    %326 = vmatpush1.xpose.msra.mxu0 0.0
    %327 = vmatprep.subr.mxu0 0.0
    %328 = vmatpush1.xpose.msra.mxu0 0.0
    %329 = vmatprep.subr.mxu0 0.0
    %330 = vmatpush1.xpose.msra.mxu0 0.0
    %331 = vmatprep.subr.mxu0 0.0
    %332 = vmatpush1.xpose.msra.mxu0 0.0
    %333 = vmatprep.subr.mxu0 0.0
    %334 = vmatpush1.xpose.msra.mxu0 0.0
    %335 = vmatprep.subr.mxu0 0.0
    %336 = vmatpush1.xpose.msra.mxu0 0.0
    %337 = vmatprep.subr.mxu0 0.0
    %338 = vmatpush1.xpose.msra.mxu0 0.0
    %339 = vmatprep.subr.mxu0 0.0
    %340 = vmatpush1.xpose.msra.mxu0 0.0
    %341 = vmatprep.subr.mxu0 0.0
    %342 = vmatpush1.xpose.msra.mxu0 0.0
    %343 = vmatprep.subr.mxu0 0.0
    %344 = vmatpush1.xpose.msra.mxu0 0.0
    %345 = vmatprep.subr.mxu0 0.0
    %346 = vmatpush1.xpose.msra.mxu0 0.0
    %347 = vmatprep.subr.mxu0 0.0
    %348 = vmatpush1.xpose.msra.mxu0 0.0
    %349 = vmatprep.subr.mxu0 0.0
    %350 = vmatpush1.xpose.msra.mxu0 0.0
    %351 = vmatprep.subr.mxu0 0.0
    %352 = vmatpush1.xpose.msra.mxu0 0.0
    %353 = vmatprep.subr.mxu0 0.0
    %354 = vmatpush1.xpose.msra.mxu0 0.0
    %355 = vmatprep.subr.mxu0 0.0
    %356 = vmatpush1.xpose.msra.mxu0 0.0
    %357 = vmatprep.subr.mxu0 0.0
    %358 = vmatpush1.xpose.msra.mxu0 0.0
    %359 = vmatprep.subr.mxu0 0.0
    %360 = vmatpush1.xpose.msra.mxu0 0.0
    %361 = vmatprep.subr.mxu0 0.0
    %362 = vmatpush1.xpose.msra.mxu0 0.0
    %363 = vmatprep.mubr.f32.mxu0 0.0
    %364 = vmatmul.mubr.f32.gmra.mrb[0].mxu0 %v285
    %v365 = vpop.f32.mrb[0].mxu0
    %v366 = vadd.f32 0.0, %v365
    %v367 = vpop.f32.mrb[0].mxu0
    %368 = vmatprep.mubr.f32.mxu0 0.0
    %369 = vmatmul.mubr.f32.gmra.mrb[0].mxu0 %v288
    %v370 = vpop.f32.mrb[0].mxu0
    %v371 = vadd.f32 0.0, %v370
    %v372 = vpop.f32.mrb[0].mxu0
    %373 = vmatprep.mubr.f32.mxu0 0.0
    %374 = vmatmul.mubr.f32.gmra.mrb[0].mxu0 %v291
    %v375 = vpop.f32.mrb[0].mxu0
    %v376 = vadd.f32 0.0, %v375
    %v377 = vpop.f32.mrb[0].mxu0
    %378 = vmatprep.mubr.f32.mxu0 0.0
    %379 = vmatmul.mubr.f32.gmra.mrb[0].mxu0 %v294
    %v380 = vpop.f32.mrb[0].mxu0
    %v381 = vadd.f32 0.0, %v380
    %v382 = vpop.f32.mrb[0].mxu0
    %383 = vmatprep.mubr.f32.mxu0 0.0
    %384 = vmatmul.mubr.f32.gmra.mrb[0].mxu0 %v297
    %v385 = vpop.f32.mrb[0].mxu0
    %v386 = vadd.f32 0.0, %v385
    %v387 = vpop.f32.mrb[0].mxu0
    %388 = vdwg.mxu0
    %v389 = vlaneseq
    %v390 = vshrl.u32 %v389, 7
    %v391 = vsub.s32 0, %v390
    %v392 = vrot.slane %v283, %v391
    %v393 = vmul.f32 %v392, %v366
    %v394 = vmul.f32 %v392, %v371
    %v395 = vmul.f32 %v392, %v376
    %v396 = vmul.f32 %v392, %v381
    %v397 = vmul.f32 %v392, %v386
    %399 = vset.pattern.permute.xlu0 0
    %400 = vperm.xlu0 %399, %v51
    %v401 = vpop.permute.xlu0 %400
    %404 = vset.pattern.permute.xlu0 0
    %405 = vperm.xlu0 %404, %v52
    %v406 = vpop.permute.xlu0 %405
    %409 = vset.pattern.permute.xlu0 0
    %410 = vperm.xlu0 %409, %v53
    %v411 = vpop.permute.xlu0 %410
    %414 = vset.pattern.permute.xlu0 0
    %415 = vperm.xlu0 %414, %v54
    %v416 = vpop.permute.xlu0 %415
    %419 = vset.pattern.permute.xlu0 0
    %420 = vperm.xlu0 %419, %v55
    %v421 = vpop.permute.xlu0 %420
    %v423 = vadd.f32 %v393, %v401
    %v424 = vadd.f32 %v394, %v406
    %v425 = vadd.f32 %v395, %v411
    %v426 = vadd.f32 %v396, %v416
    %v427 = vadd.f32 %v397, %v421
    %v428 = vmul.f32 %v423, %v423
    %v429 = vmul.f32 %v424, %v424
    %v430 = vmul.f32 %v425, %v425
    %v431 = vmul.f32 %v426, %v426
    %v432 = vmul.f32 %v427, %v427
    %vm433 = vcmask 64512
    %v434 = vsel %vm433, %v428, 0.0
    %v435 = vsel %vm433, %v429, 0.0
    %v436 = vadd.f32 %v434, %v435
    %v437 = vsel %vm433, %v430, 0.0
    %v438 = vadd.f32 %v436, %v437
    %v439 = vsel %vm433, %v431, 0.0
    %v440 = vadd.f32 %v438, %v439
    %vm441 = vcmask 57344
    %v442 = vsel %vm441, %v432, 0.0
    %v443 = vadd.f32 %v440, %v442
    %v444 = vrot.slane %v443, 4
    %v445 = vadd.f32 %v443, %v444
    %v446 = vrot.slane %v445, 2
    %v447 = vadd.f32 %v445, %v446
    %v448 = vrot.slane %v447, 1
    %v449 = vadd.f32 %v447, %v448
    %v450 = vmax.f32 %v449, 1e-24
    %v451 = vrsqrt.pop %v450
    %v452 = vmul.f32 %v449, %v451
    %v453 = vmul.f32 %v452, 0.1
    %v454 = vand.u32 2147483647, %v453
    %vm455 = vcmp.le.f32.partialorder %v454, 0.7853982
    %vm456 = vcmp.lt.s32.totalorder %v453, 0
    %v457 = vand.u32 %v453, 2139095040
    %v458 = vshrl.u32 %v457, 23
    %v459 = vsub.s32 %v458, 127
    %v460 = vand.u32 2147483647, %v453
    %v461 = vand.u32 %v460, 8388607
    %v462 = vor.u32 %v461, 8388608
    %v463 = vsub.s32 0, %v462
    %v464 = vadd.s32 %v459, 1
    %vm465 = vcmp.gt.s32.totalorder %v464, 0
    %v466 = vsel %vm465, %v464, 0
    %v467 = vshrl.u32 %v466, 5
    %v468 = vand.u32 %v466, 31
    %v469 = vsub.s32 32, %v468
    %v470 = vshrl.u32 683565275, %v469
    %v471 = vshll.u32 683565275, %v468
    %v472 = vshrl.u32 2475754826, %v469
    %v473 = vor.u32 %v471, %v472
    %v474 = vshll.u32 2475754826, %v468
    %v475 = vshrl.u32 2131351028, %v469
    %v476 = vor.u32 %v474, %v475
    %v477 = vshll.u32 2131351028, %v468
    %v478 = vshrl.u32 2102212464, %v469
    %v479 = vor.u32 %v477, %v478
    %v480 = vshll.u32 2102212464, %v468
    %v481 = vshrl.u32 920167782, %v469
    %v482 = vor.u32 %v480, %v481
    %v483 = vshll.u32 920167782, %v468
    %v484 = vshrl.u32 1326507024, %v469
    %v485 = vor.u32 %v483, %v484
    %vm486 = vcmp.lt.s32.totalorder %v467, 1
    %vm487 = vcmp.lt.s32.totalorder %v467, 2
    %vm488 = vcmp.lt.s32.totalorder %v467, 3
    %vm489 = vcmp.lt.s32.totalorder %v467, 4
    %v490 = vsel %vm486, %v470, %v473
    %v491 = vsel %vm489, %v479, 2102212464
    %v492 = vsel %vm488, %v476, %v491
    %v493 = vsel %vm487, %v490, %v492
    %v494 = vsel %vm486, %v473, %v476
    %v495 = vsel %vm489, %v482, 920167782
    %v496 = vsel %vm488, %v479, %v495
    %v497 = vsel %vm487, %v494, %v496
    %v498 = vsel %vm486, %v476, %v479
    %v499 = vsel %vm489, %v485, 1326507024
    %v500 = vsel %vm488, %v482, %v499
    %v501 = vsel %vm487, %v498, %v500
    %v502 = vshll.u32 %v462, 8
    %v503 = vmul.u32.u64.compose %v502, %v501
    %v504 = vextract.low.u32 %v503
    %v505 = vextract.high.u32 %v503
    %v506 = vmul.u32.u64.compose %v502, %v497
    %v507 = vextract.low.u32 %v506
    %v508 = vextract.high.u32 %v506
    %v509 = vmul.u32 %v502, %v493
    %v510 = vadd.s32 %v505, %v507
    %vm511 = vc.u32 %v505, %v507
    %v512 = vadd.s32 %v508, 1
    %v513 = vsel %vm511, %v512, %v508
    %v514 = vadd.s32 %v509, %v513
    %v515 = vadd.s32 %v514, 536870912
    %v516 = vshrl.u32 %v515, 30
    %v517 = vshll.u32 %v516, 30
    %v518 = vsub.s32 %v514, %v517
    %vm519 = vcmp.lt.s32.totalorder %v518, 0
    %v520 = vsub.s32 0, %v518
    %v521 = vsel %vm519, %v520, %v518
    %v522 = vclz %v521
    %v523 = vsub.s32 %v522, 2
    %vm524 = vcmp.gt.s32.totalorder 0, %v523
    %v525 = vsel %vm524, 0, %v523
    %v526 = vsub.s32 32, %v525
    %v527 = vshll.u32 %v518, %v525
    %v528 = vshrl.u32 %v510, %v526
    %v529 = vor.u32 %v527, %v528
    %v530 = vsub.s32 4294967266, %v525
    %v531 = vadd.s32 %v530, 127
    %v532 = vshll.u32 %v531, 23
    %v533 = vor.u32 4788187, %v532
    %v534 = vand.u32 2147483647, %v533
    %v536 = vcvt.s32.f32 %v529
    %v537 = vmul.f32 %v536, %v534
    %v538 = vxor.u32 %v537, 2147483648
    %v539 = vsel %vm456, %v538, %v537
    %v540 = vsub.s32 4, %v516
    %v541 = vsel %vm456, %v540, %v516
    %v542 = vsel %vm455, %v453, %v539
    %v543 = vsel %vm455, 0, %v541
    %v544 = vcosq.f32.pop %v542
    %v545 = vsinq.f32.pop %v542
    %vm546 = vweird.f32 %v453
    %v547 = vadd.s32 %v543, 3
    %v548 = vand.u32 %v547, 3
    %vm549 = vcmp.lt.s32.totalorder %v548, 2
    %vm550 = vcmp.eq.s32.totalorder %v548, 0
    %v551 = vxor.u32 %v545, 2147483648
    %v552 = vsel %vm550, %v544, %v551
    %vm553 = vcmp.eq.s32.totalorder %v548, 2
    %v554 = vxor.u32 %v544, 2147483648
    %v555 = vsel %vm553, %v554, %v545
    %v556 = vsel %vm549, %v552, %v555
    %v557 = vsel %vm546, nan, %v556
    %v558 = vand.u32 2147483647, %v453
    %vm559 = vcmp.le.f32.partialorder %v558, 0.7853982
    %vm560 = vcmp.lt.s32.totalorder %v453, 0
    %v561 = vand.u32 %v453, 2139095040
    %v562 = vshrl.u32 %v561, 23
    %v563 = vsub.s32 %v562, 127
    %v564 = vand.u32 2147483647, %v453
    %v565 = vand.u32 %v564, 8388607
    %v566 = vor.u32 %v565, 8388608
    %v567 = vsub.s32 0, %v566
    %v568 = vadd.s32 %v563, 1
    %vm569 = vcmp.gt.s32.totalorder %v568, 0
    %v570 = vsel %vm569, %v568, 0
    %v571 = vshrl.u32 %v570, 5
    %v572 = vand.u32 %v570, 31
    %v573 = vsub.s32 32, %v572
    %v574 = vshrl.u32 683565275, %v573
    %v575 = vshll.u32 683565275, %v572
    %v576 = vshrl.u32 2475754826, %v573
    %v577 = vor.u32 %v575, %v576
    %v578 = vshll.u32 2475754826, %v572
    %v579 = vshrl.u32 2131351028, %v573
    %v580 = vor.u32 %v578, %v579
    %v581 = vshll.u32 2131351028, %v572
    %v582 = vshrl.u32 2102212464, %v573
    %v583 = vor.u32 %v581, %v582
    %v584 = vshll.u32 2102212464, %v572
    %v585 = vshrl.u32 920167782, %v573
    %v586 = vor.u32 %v584, %v585
    %v587 = vshll.u32 920167782, %v572
    %v588 = vshrl.u32 1326507024, %v573
    %v589 = vor.u32 %v587, %v588
    %vm590 = vcmp.lt.s32.totalorder %v571, 1
    %vm591 = vcmp.lt.s32.totalorder %v571, 2
    %vm592 = vcmp.lt.s32.totalorder %v571, 3
    %vm593 = vcmp.lt.s32.totalorder %v571, 4
    %v594 = vsel %vm590, %v574, %v577
    %v595 = vsel %vm593, %v583, 2102212464
    %v596 = vsel %vm592, %v580, %v595
    %v597 = vsel %vm591, %v594, %v596
    %v598 = vsel %vm590, %v577, %v580
    %v599 = vsel %vm593, %v586, 920167782
    %v600 = vsel %vm592, %v583, %v599
    %v601 = vsel %vm591, %v598, %v600
    %v602 = vsel %vm590, %v580, %v583
    %v603 = vsel %vm593, %v589, 1326507024
    %v604 = vsel %vm592, %v586, %v603
    %v605 = vsel %vm591, %v602, %v604
    %v606 = vshll.u32 %v566, 8
    %v607 = vmul.u32.u64.compose %v606, %v605
    %v608 = vextract.low.u32 %v607
    %v609 = vextract.high.u32 %v607
    %v610 = vmul.u32.u64.compose %v606, %v601
    %v611 = vextract.low.u32 %v610
    %v612 = vextract.high.u32 %v610
    %v613 = vmul.u32 %v606, %v597
    %v614 = vadd.s32 %v609, %v611
    %vm615 = vc.u32 %v609, %v611
    %v616 = vadd.s32 %v612, 1
    %v617 = vsel %vm615, %v616, %v612
    %v618 = vadd.s32 %v613, %v617
    %v619 = vadd.s32 %v618, 536870912
    %v620 = vshrl.u32 %v619, 30
    %v621 = vshll.u32 %v620, 30
    %v622 = vsub.s32 %v618, %v621
    %vm623 = vcmp.lt.s32.totalorder %v622, 0
    %v624 = vsub.s32 0, %v622
    %v625 = vsel %vm623, %v624, %v622
    %v626 = vclz %v625
    %v627 = vsub.s32 %v626, 2
    %vm628 = vcmp.gt.s32.totalorder 0, %v627
    %v629 = vsel %vm628, 0, %v627
    %v630 = vsub.s32 32, %v629
    %v631 = vshll.u32 %v622, %v629
    %v632 = vshrl.u32 %v614, %v630
    %v633 = vor.u32 %v631, %v632
    %v634 = vsub.s32 4294967266, %v629
    %v635 = vadd.s32 %v634, 127
    %v636 = vshll.u32 %v635, 23
    %v637 = vor.u32 4788187, %v636
    %v638 = vand.u32 2147483647, %v637
    %v640 = vcvt.s32.f32 %v633
    %v641 = vmul.f32 %v640, %v638
    %v642 = vxor.u32 %v641, 2147483648
    %v643 = vsel %vm560, %v642, %v641
    %v644 = vsub.s32 4, %v620
    %v645 = vsel %vm560, %v644, %v620
    %v646 = vsel %vm559, %v453, %v643
    %v647 = vsel %vm559, 0, %v645
    %v648 = vcosq.f32.pop %v646
    %v649 = vsinq.f32.pop %v646
    %vm650 = vweird.f32 %v453
    %v651 = vand.u32 %v647, 3
    %vm652 = vcmp.lt.s32.totalorder %v651, 2
    %vm653 = vcmp.eq.s32.totalorder %v651, 0
    %v654 = vxor.u32 %v649, 2147483648
    %v655 = vsel %vm653, %v648, %v654
    %vm656 = vcmp.eq.s32.totalorder %v651, 2
    %v657 = vxor.u32 %v648, 2147483648
    %v658 = vsel %vm656, %v657, %v649
    %v659 = vsel %vm652, %v655, %v658
    %v660 = vsel %vm650, nan, %v659
    %v661 = vmul.f32 %v660, 10.0
    %v662 = vmul.f32 %v557, 10.0
    %v663 = vmul.f32 %v423, %v451
    %v664 = vmul.f32 %v424, %v451
    %v665 = vmul.f32 %v425, %v451
    %v666 = vmul.f32 %v426, %v451
    %v667 = vmul.f32 %v427, %v451
    %v668 = vmul.f32 %v662, %v663
    %v669 = vmul.f32 %v662, %v664
    %v670 = vmul.f32 %v662, %v665
    %v671 = vmul.f32 %v662, %v666
    %v672 = vmul.f32 %v662, %v667
    %v673 = vsel %vm40, 1, 0
    %v674 = vsel %vm41, 1, 0
    %v675 = vsel %vm42, 1, 0
    %v676 = vsel %vm43, 1, 0
    %v677 = vsel %vm44, 1, 0
    %vm678 = vcmp.eq.s32.totalorder %v673, 1
    %vm679 = vcmp.eq.s32.totalorder %v674, 1
    %vm680 = vcmp.eq.s32.totalorder %v675, 1
    %vm681 = vcmp.eq.s32.totalorder %v676, 1
    %vm682 = vcmp.eq.s32.totalorder %v677, 1
    %v683 = vsel %vm678, %v661, %v668
    %v684 = vsel %vm679, %v661, %v669
    %v685 = vsel %vm680, %v661, %v670
    %v686 = vsel %vm681, %v661, %v671
    %v687 = vsel %vm682, %v661, %v672
    %v688 = vmax.f32 %v683, 0.0
    %v689 = vmax.f32 %v684, 0.0
    %v690 = vmax.f32 %v685, 0.0
    %v691 = vmax.f32 %v686, 0.0
    %v692 = vmax.f32 %v687, 0.0
    %v693 = vmul.f32 %v688, %v688
    %v694 = vmul.f32 %v689, %v689
    %v695 = vmul.f32 %v690, %v690
    %v696 = vmul.f32 %v691, %v691
    %v697 = vmul.f32 %v692, %v692
    %v698 = vsel %vm433, %v693, 0.0
    %v699 = vsel %vm433, %v694, 0.0
    %v700 = vadd.f32 %v698, %v699
    %v701 = vsel %vm433, %v695, 0.0
    %v702 = vadd.f32 %v700, %v701
    %v703 = vsel %vm433, %v696, 0.0
    %v704 = vadd.f32 %v702, %v703
    %v705 = vsel %vm441, %v697, 0.0
    %v706 = vadd.f32 %v704, %v705
    %v707 = vrot.slane %v706, 4
    %v708 = vadd.f32 %v706, %v707
    %v709 = vrot.slane %v708, 2
    %v710 = vadd.f32 %v708, %v709
    %v711 = vrot.slane %v710, 1
    %v712 = vadd.f32 %v710, %v711
    %v713 = vmul.f32 %v688, 10.0
    %v714 = vmul.f32 %v689, 10.0
    %v715 = vmul.f32 %v690, 10.0
    %v716 = vmul.f32 %v691, 10.0
    %v717 = vmul.f32 %v692, 10.0
    %v718 = vmax.f32 %v712, 1e-24
    %v719 = vrsqrt.pop %v718
    %v720 = vmul.f32 %v713, %v719
    %v721 = vmul.f32 %v714, %v719
    %v722 = vmul.f32 %v715, %v719
    %v723 = vmul.f32 %v716, %v719
    %v724 = vmul.f32 %v717, %v719
    %v725 = vld [vmem:[%s3] sm:$0xff]
    %v726 = vld [vmem:[%s3 + $0x8] sm:$0xff]
    %v727 = vld [vmem:[%s3 + $0x10] sm:$0xff]
    %v728 = vld [vmem:[%s3 + $0x18] sm:$0xff]
    %v729 = vld [vmem:[%s3 + $0x20] sm:$0x1]
    %v730 = vld [vmem:[%s4] sm:$0xff]
    %v731 = vld [vmem:[%s4 + $0x8] sm:$0xff]
    %v732 = vld [vmem:[%s4 + $0x10] sm:$0xff]
    %v733 = vld [vmem:[%s4 + $0x18] sm:$0xff]
    %v734 = vld [vmem:[%s4 + $0x20] sm:$0x1]
    %vm735 = vcmask 269312
    %v737 = vsel %vm735, %v32, 0
    %vm739 = vcmask 1040384
    %v741 = vsel %vm739, %v724, 0
    %743 = vmatprep.subr.mxu0 0.0
    %744 = vmatpush1.msra.mxu0 %v720
    %745 = vmatprep.subr.mxu0 0.0
    %746 = vmatpush1.msra.mxu0 %v721
    %747 = vmatprep.subr.mxu0 0.0
    %748 = vmatpush1.msra.mxu0 %v722
    %749 = vmatprep.subr.mxu0 0.0
    %750 = vmatpush1.msra.mxu0 %v723
    %751 = vmatprep.subr.mxu0 0.0
    %752 = vmatpush1.msra.mxu0 %v741
    %753 = vmatprep.subr.mxu0 0.0
    %754 = vmatpush1.msra.mxu0 0.0
    %755 = vmatprep.subr.mxu0 0.0
    %756 = vmatpush1.msra.mxu0 0.0
    %757 = vmatprep.subr.mxu0 0.0
    %758 = vmatpush1.msra.mxu0 0.0
    %759 = vmatprep.subr.mxu0 0.0
    %760 = vmatpush1.msra.mxu0 0.0
    %761 = vmatprep.subr.mxu0 0.0
    %762 = vmatpush1.msra.mxu0 0.0
    %763 = vmatprep.subr.mxu0 0.0
    %764 = vmatpush1.msra.mxu0 0.0
    %765 = vmatprep.subr.mxu0 0.0
    %766 = vmatpush1.msra.mxu0 0.0
    %767 = vmatprep.subr.mxu0 0.0
    %768 = vmatpush1.msra.mxu0 0.0
    %769 = vmatprep.subr.mxu0 0.0
    %770 = vmatpush1.msra.mxu0 0.0
    %771 = vmatprep.subr.mxu0 0.0
    %772 = vmatpush1.msra.mxu0 0.0
    %773 = vmatprep.subr.mxu0 0.0
    %774 = vmatpush1.msra.mxu0 0.0
    %775 = vmatprep.subr.mxu0 0.0
    %776 = vmatpush1.msra.mxu0 0.0
    %777 = vmatprep.subr.mxu0 0.0
    %778 = vmatpush1.msra.mxu0 0.0
    %779 = vmatprep.subr.mxu0 0.0
    %780 = vmatpush1.msra.mxu0 0.0
    %781 = vmatprep.subr.mxu0 0.0
    %782 = vmatpush1.msra.mxu0 0.0
    %783 = vmatprep.subr.mxu0 0.0
    %784 = vmatpush1.msra.mxu0 0.0
    %785 = vmatprep.subr.mxu0 0.0
    %786 = vmatpush1.msra.mxu0 0.0
    %787 = vmatprep.subr.mxu0 0.0
    %788 = vmatpush1.msra.mxu0 0.0
    %789 = vmatprep.subr.mxu0 0.0
    %790 = vmatpush1.msra.mxu0 0.0
    %791 = vmatprep.subr.mxu0 0.0
    %792 = vmatpush1.msra.mxu0 0.0
    %793 = vmatprep.subr.mxu0 0.0
    %794 = vmatpush1.msra.mxu0 0.0
    %795 = vmatprep.subr.mxu0 0.0
    %796 = vmatpush1.msra.mxu0 0.0
    %797 = vmatprep.subr.mxu0 0.0
    %798 = vmatpush1.msra.mxu0 0.0
    %799 = vmatprep.subr.mxu0 0.0
    %800 = vmatpush1.msra.mxu0 0.0
    %801 = vmatprep.subr.mxu0 0.0
    %802 = vmatpush1.msra.mxu0 0.0
    %803 = vmatprep.subr.mxu0 0.0
    %804 = vmatpush1.msra.mxu0 0.0
    %805 = vmatprep.subr.mxu0 0.0
    %806 = vmatpush1.msra.mxu0 0.0
    %807 = vmatprep.mubr.f32.mxu0 0.0
    %808 = vmatmul.mubr.f32.gmra.mrb[0].mxu0 %v737
    %v809 = vpop.f32.mrb[0].mxu0
    %v810 = vadd.f32 0.0, %v809
    %v811 = vpop.f32.mrb[0].mxu0
    %812 = vdwg.mxu0
    %v813 = vmul.f32 %v720, %v720
    %v814 = vmul.f32 %v721, %v721
    %v815 = vmul.f32 %v722, %v722
    %v816 = vmul.f32 %v723, %v723
    %v817 = vmul.f32 %v724, %v724
    %v819 = vsel %vm735, %v33, 0
    %v822 = vsel %vm739, %v817, 0
    %824 = vmatprep.subr.mxu0 0.0
    %825 = vmatpush1.msra.mxu0 %v813
    %826 = vmatprep.subr.mxu0 0.0
    %827 = vmatpush1.msra.mxu0 %v814
    %828 = vmatprep.subr.mxu0 0.0
    %829 = vmatpush1.msra.mxu0 %v815
    %830 = vmatprep.subr.mxu0 0.0
    %831 = vmatpush1.msra.mxu0 %v816
    %832 = vmatprep.subr.mxu0 0.0
    %833 = vmatpush1.msra.mxu0 %v822
    %834 = vmatprep.subr.mxu0 0.0
    %835 = vmatpush1.msra.mxu0 0.0
    %836 = vmatprep.subr.mxu0 0.0
    %837 = vmatpush1.msra.mxu0 0.0
    %838 = vmatprep.subr.mxu0 0.0
    %839 = vmatpush1.msra.mxu0 0.0
    %840 = vmatprep.subr.mxu0 0.0
    %841 = vmatpush1.msra.mxu0 0.0
    %842 = vmatprep.subr.mxu0 0.0
    %843 = vmatpush1.msra.mxu0 0.0
    %844 = vmatprep.subr.mxu0 0.0
    %845 = vmatpush1.msra.mxu0 0.0
    %846 = vmatprep.subr.mxu0 0.0
    %847 = vmatpush1.msra.mxu0 0.0
    %848 = vmatprep.subr.mxu0 0.0
    %849 = vmatpush1.msra.mxu0 0.0
    %850 = vmatprep.subr.mxu0 0.0
    %851 = vmatpush1.msra.mxu0 0.0
    %852 = vmatprep.subr.mxu0 0.0
    %853 = vmatpush1.msra.mxu0 0.0
    %854 = vmatprep.subr.mxu0 0.0
    %855 = vmatpush1.msra.mxu0 0.0
    %856 = vmatprep.subr.mxu0 0.0
    %857 = vmatpush1.msra.mxu0 0.0
    %858 = vmatprep.subr.mxu0 0.0
    %859 = vmatpush1.msra.mxu0 0.0
    %860 = vmatprep.subr.mxu0 0.0
    %861 = vmatpush1.msra.mxu0 0.0
    %862 = vmatprep.subr.mxu0 0.0
    %863 = vmatpush1.msra.mxu0 0.0
    %864 = vmatprep.subr.mxu0 0.0
    %865 = vmatpush1.msra.mxu0 0.0
    %866 = vmatprep.subr.mxu0 0.0
    %867 = vmatpush1.msra.mxu0 0.0
    %868 = vmatprep.subr.mxu0 0.0
    %869 = vmatpush1.msra.mxu0 0.0
    %870 = vmatprep.subr.mxu0 0.0
    %871 = vmatpush1.msra.mxu0 0.0
    %872 = vmatprep.subr.mxu0 0.0
    %873 = vmatpush1.msra.mxu0 0.0
    %874 = vmatprep.subr.mxu0 0.0
    %875 = vmatpush1.msra.mxu0 0.0
    %876 = vmatprep.subr.mxu0 0.0
    %877 = vmatpush1.msra.mxu0 0.0
    %878 = vmatprep.subr.mxu0 0.0
    %879 = vmatpush1.msra.mxu0 0.0
    %880 = vmatprep.subr.mxu0 0.0
    %881 = vmatpush1.msra.mxu0 0.0
    %882 = vmatprep.subr.mxu0 0.0
    %883 = vmatpush1.msra.mxu0 0.0
    %884 = vmatprep.subr.mxu0 0.0
    %885 = vmatpush1.msra.mxu0 0.0
    %886 = vmatprep.subr.mxu0 0.0
    %887 = vmatpush1.msra.mxu0 0.0
    %888 = vmatprep.mubr.f32.mxu0 0.0
    %889 = vmatmul.mubr.f32.gmra.mrb[0].mxu0 %v819
    %v890 = vpop.f32.mrb[0].mxu0
    %v891 = vadd.f32 0.0, %v890
    %v892 = vpop.f32.mrb[0].mxu0
    %893 = vdwg.mxu0
    %v894 = vmul.f32 %v810, %v810
    %v895 = vadd.f32 %v891, %v894
    %v896 = vmax.f32 %v895, 1e-18
    %v897 = vrsqrt.pop %v896
    %v898 = vmul.f32 %v810, %v897
    %v899 = vand.u32 2147483647, %v898
    %vm900 = vcmp.gt.f32.partialorder %v899, 0.9999
    %v901 = vmul.f32 %v898, 0.9999
    %v902 = vsel %vm900, %v901, %v898
    %v903 = vmul.f32 %v902, %v902
    %v904 = vsub.f32 1.0, %v903
    %v905 = vmax.f32 %v904, 0.0
    %v906 = vrsqrt.pop %v905
    %v907 = vmul.f32 %v905, %v906
    %vm908 = vcmp.eq.f32.partialorder %v905, inf
    %v909 = vsel %vm908, %v905, %v907
    %vm910 = vcmp.eq.f32.partialorder %v905, 0.0
    %v911 = vand.u32 %v905, 2147483648
    %v912 = vsel %vm910, %v911, %v909
    %v913 = vand.u32 2147483647, %v902
    %v914 = vand.u32 2147483647, %v912
    %v915 = vmin.f32 %v913, %v914
    %v916 = vmax.f32 %v913, %v914
    %v917 = vrcp.pop %v916
    %v918 = vmul.f32 %v915, %v917
    %v919 = vmul.f32 %v918, %v918
    %v920 = vmul.f32 0.002785687, %v919
    %v921 = vadd.f32 %v920, -0.015866
    %v922 = vmul.f32 %v921, %v919
    %v923 = vadd.f32 %v922, 0.04247222
    %v924 = vmul.f32 %v923, %v919
    %v925 = vadd.f32 %v924, -0.074975304
    %v926 = vmul.f32 %v925, %v919
    %v927 = vadd.f32 %v926, 0.1064488
    %v928 = vmul.f32 %v927, %v919
    %v929 = vadd.f32 %v928, -0.14207031
    %v930 = vmul.f32 %v929, %v919
    %v931 = vadd.f32 %v930, 0.19993454
    %v932 = vmul.f32 %v931, %v919
    %v933 = vadd.f32 %v932, -0.33333147
    %v934 = vmul.f32 %v933, %v919
    %v935 = vmul.f32 %v934, %v918
    %v936 = vadd.f32 %v935, %v918
    %vm937 = vcmp.gt.f32.partialorder %v914, %v913
    %v938 = vsub.f32 1.5707964, %v936
    %v939 = vsel %vm937, %v938, %v936
    %vm940 = vcmp.lt.f32.partialorder %v902, 0.0
    %v941 = vsub.f32 3.1415927, %v939
    %v942 = vsel %vm940, %v941, %v939
    %vm943 = vcmp.lt.s32.totalorder %v902, 0
    %v944 = vsel %vm943, 3.1415927, 0.0
    %vm945 = vcmp.eq.f32.partialorder %v912, 0.0
    %v946 = vsel %vm945, %v944, %v942
    %vm947 = vcmp.ne.f32.partialorder %v902, %v902
    %vm948 = vcmp.ne.f32.partialorder %v912, %v912
    %vm949 = vmor %vm947, %vm948
    %v950 = vsel %vm949, nan, %v946
    %vm951 = vcmp.lt.f32.partialorder %v902, 0.0
    %v952 = vsel %vm951, 2.3561945, 0.7853982
    %vm953 = vcmp.eq.s32.totalorder %v913, inf
    %vm954 = vcmp.eq.s32.totalorder %v914, inf
    %vm955 = vmand %vm953, %vm954
    %v956 = vsel %vm955, %v952, %v950
    %v957 = vand.u32 2147483647, %v956
    %v958 = vand.u32 %v912, 2147483648
    %v959 = vor.u32 %v957, %v958
    %v960 = vmul.f32 %v902, 10.0
    %v961 = vsub.f32 %v810, %v960
    %v962 = vmul.f32 %v961, %v961
    %v963 = vadd.f32 %v891, %v962
    %v964 = vmax.f32 %v963, 1e-24
    %v965 = vrsqrt.pop %v964
    %v966 = vmul.f32 %v959, 10.0
    %v967 = vmul.f32 %v966, %v965
    %v969 = vsel %vm735, %v725, 0
    %v972 = vsel %vm735, %v726, 0
    %v975 = vsel %vm735, %v727, 0
    %v978 = vsel %vm735, %v728, 0
    %v981 = vsel %vm735, %v729, 0
    %983 = vmatprep.subr.mxu0 0.0
    %984 = vmatpush1.msra.mxu0 %v720
    %985 = vmatprep.subr.mxu0 0.0
    %986 = vmatpush1.msra.mxu0 %v721
    %987 = vmatprep.subr.mxu0 0.0
    %988 = vmatpush1.msra.mxu0 %v722
    %989 = vmatprep.subr.mxu0 0.0
    %990 = vmatpush1.msra.mxu0 %v723
    %991 = vmatprep.subr.mxu0 0.0
    %992 = vmatpush1.msra.mxu0 %v741
    %993 = vmatprep.subr.mxu0 0.0
    %994 = vmatpush1.msra.mxu0 0.0
    %995 = vmatprep.subr.mxu0 0.0
    %996 = vmatpush1.msra.mxu0 0.0
    %997 = vmatprep.subr.mxu0 0.0
    %998 = vmatpush1.msra.mxu0 0.0
    %999 = vmatprep.subr.mxu0 0.0
    %1000 = vmatpush1.msra.mxu0 0.0
    %1001 = vmatprep.subr.mxu0 0.0
    %1002 = vmatpush1.msra.mxu0 0.0
    %1003 = vmatprep.subr.mxu0 0.0
    %1004 = vmatpush1.msra.mxu0 0.0
    %1005 = vmatprep.subr.mxu0 0.0
    %1006 = vmatpush1.msra.mxu0 0.0
    %1007 = vmatprep.subr.mxu0 0.0
    %1008 = vmatpush1.msra.mxu0 0.0
    %1009 = vmatprep.subr.mxu0 0.0
    %1010 = vmatpush1.msra.mxu0 0.0
    %1011 = vmatprep.subr.mxu0 0.0
    %1012 = vmatpush1.msra.mxu0 0.0
    %1013 = vmatprep.subr.mxu0 0.0
    %1014 = vmatpush1.msra.mxu0 0.0
    %1015 = vmatprep.subr.mxu0 0.0
    %1016 = vmatpush1.msra.mxu0 0.0
    %1017 = vmatprep.subr.mxu0 0.0
    %1018 = vmatpush1.msra.mxu0 0.0
    %1019 = vmatprep.subr.mxu0 0.0
    %1020 = vmatpush1.msra.mxu0 0.0
    %1021 = vmatprep.subr.mxu0 0.0
    %1022 = vmatpush1.msra.mxu0 0.0
    %1023 = vmatprep.subr.mxu0 0.0
    %1024 = vmatpush1.msra.mxu0 0.0
    %1025 = vmatprep.subr.mxu0 0.0
    %1026 = vmatpush1.msra.mxu0 0.0
    %1027 = vmatprep.subr.mxu0 0.0
    %1028 = vmatpush1.msra.mxu0 0.0
    %1029 = vmatprep.subr.mxu0 0.0
    %1030 = vmatpush1.msra.mxu0 0.0
    %1031 = vmatprep.subr.mxu0 0.0
    %1032 = vmatpush1.msra.mxu0 0.0
    %1033 = vmatprep.subr.mxu0 0.0
    %1034 = vmatpush1.msra.mxu0 0.0
    %1035 = vmatprep.subr.mxu0 0.0
    %1036 = vmatpush1.msra.mxu0 0.0
    %1037 = vmatprep.subr.mxu0 0.0
    %1038 = vmatpush1.msra.mxu0 0.0
    %1039 = vmatprep.subr.mxu0 0.0
    %1040 = vmatpush1.msra.mxu0 0.0
    %1041 = vmatprep.subr.mxu0 0.0
    %1042 = vmatpush1.msra.mxu0 0.0
    %1043 = vmatprep.subr.mxu0 0.0
    %1044 = vmatpush1.msra.mxu0 0.0
    %1045 = vmatprep.subr.mxu0 0.0
    %1046 = vmatpush1.msra.mxu0 0.0
    %1047 = vmatprep.mubr.f32.mxu0 0.0
    %1048 = vmatmul.mubr.f32.gmra.mrb[0].mxu0 %v969
    %v1049 = vpop.f32.mrb[0].mxu0
    %v1050 = vadd.f32 0.0, %v1049
    %v1051 = vpop.f32.mrb[0].mxu0
    %1052 = vmatprep.mubr.f32.mxu0 0.0
    %1053 = vmatmul.mubr.f32.gmra.mrb[0].mxu0 %v972
    %v1054 = vpop.f32.mrb[0].mxu0
    %v1055 = vadd.f32 0.0, %v1054
    %v1056 = vpop.f32.mrb[0].mxu0
    %1057 = vmatprep.mubr.f32.mxu0 0.0
    %1058 = vmatmul.mubr.f32.gmra.mrb[0].mxu0 %v975
    %v1059 = vpop.f32.mrb[0].mxu0
    %v1060 = vadd.f32 0.0, %v1059
    %v1061 = vpop.f32.mrb[0].mxu0
    %1062 = vmatprep.mubr.f32.mxu0 0.0
    %1063 = vmatmul.mubr.f32.gmra.mrb[0].mxu0 %v978
    %v1064 = vpop.f32.mrb[0].mxu0
    %v1065 = vadd.f32 0.0, %v1064
    %v1066 = vpop.f32.mrb[0].mxu0
    %1067 = vmatprep.mubr.f32.mxu0 0.0
    %1068 = vmatmul.mubr.f32.gmra.mrb[0].mxu0 %v981
    %v1069 = vpop.f32.mrb[0].mxu0
    %v1070 = vadd.f32 0.0, %v1069
    %v1071 = vpop.f32.mrb[0].mxu0
    %1072 = vdwg.mxu0
    %v1073 = vlaneseq
    %v1074 = vshrl.u32 %v1073, 7
    %v1075 = vsub.s32 0, %v1074
    %v1076 = vrot.slane %v967, %v1075
    %v1077 = vmul.f32 %v1076, %v1050
    %v1078 = vmul.f32 %v1076, %v1055
    %v1079 = vmul.f32 %v1076, %v1060
    %v1080 = vmul.f32 %v1076, %v1065
    %v1081 = vmul.f32 %v1076, %v1070
    %1083 = vset.pattern.permute.xlu0 0
    %1084 = vperm.xlu0 %1083, %v730
    %v1085 = vpop.permute.xlu0 %1084
    %1088 = vset.pattern.permute.xlu0 0
    %1089 = vperm.xlu0 %1088, %v731
    %v1090 = vpop.permute.xlu0 %1089
    %1093 = vset.pattern.permute.xlu0 0
    %1094 = vperm.xlu0 %1093, %v732
    %v1095 = vpop.permute.xlu0 %1094
    %1098 = vset.pattern.permute.xlu0 0
    %1099 = vperm.xlu0 %1098, %v733
    %v1100 = vpop.permute.xlu0 %1099
    %1103 = vset.pattern.permute.xlu0 0
    %1104 = vperm.xlu0 %1103, %v734
    %v1105 = vpop.permute.xlu0 %1104
    %v1107 = vadd.f32 %v1077, %v1085
    %v1108 = vadd.f32 %v1078, %v1090
    %v1109 = vadd.f32 %v1079, %v1095
    %v1110 = vadd.f32 %v1080, %v1100
    %v1111 = vadd.f32 %v1081, %v1105
    %v1112 = vmul.f32 %v1107, %v1107
    %v1113 = vmul.f32 %v1108, %v1108
    %v1114 = vmul.f32 %v1109, %v1109
    %v1115 = vmul.f32 %v1110, %v1110
    %v1116 = vmul.f32 %v1111, %v1111
    %v1117 = vsel %vm433, %v1112, 0.0
    %v1118 = vsel %vm433, %v1113, 0.0
    %v1119 = vadd.f32 %v1117, %v1118
    %v1120 = vsel %vm433, %v1114, 0.0
    %v1121 = vadd.f32 %v1119, %v1120
    %v1122 = vsel %vm433, %v1115, 0.0
    %v1123 = vadd.f32 %v1121, %v1122
    %v1124 = vsel %vm441, %v1116, 0.0
    %v1125 = vadd.f32 %v1123, %v1124
    %v1126 = vrot.slane %v1125, 4
    %v1127 = vadd.f32 %v1125, %v1126
    %v1128 = vrot.slane %v1127, 2
    %v1129 = vadd.f32 %v1127, %v1128
    %v1130 = vrot.slane %v1129, 1
    %v1131 = vadd.f32 %v1129, %v1130
    %v1132 = vmax.f32 %v1131, 1e-24
    %v1133 = vrsqrt.pop %v1132
    %v1134 = vmul.f32 %v1131, %v1133
    %v1135 = vmul.f32 %v1134, 0.1
    %v1136 = vand.u32 2147483647, %v1135
    %vm1137 = vcmp.le.f32.partialorder %v1136, 0.7853982
    %vm1138 = vcmp.lt.s32.totalorder %v1135, 0
    %v1139 = vand.u32 %v1135, 2139095040
    %v1140 = vshrl.u32 %v1139, 23
    %v1141 = vsub.s32 %v1140, 127
    %v1142 = vand.u32 2147483647, %v1135
    %v1143 = vand.u32 %v1142, 8388607
    %v1144 = vor.u32 %v1143, 8388608
    %v1145 = vsub.s32 0, %v1144
    %v1146 = vadd.s32 %v1141, 1
    %vm1147 = vcmp.gt.s32.totalorder %v1146, 0
    %v1148 = vsel %vm1147, %v1146, 0
    %v1149 = vshrl.u32 %v1148, 5
    %v1150 = vand.u32 %v1148, 31
    %v1151 = vsub.s32 32, %v1150
    %v1152 = vshrl.u32 683565275, %v1151
    %v1153 = vshll.u32 683565275, %v1150
    %v1154 = vshrl.u32 2475754826, %v1151
    %v1155 = vor.u32 %v1153, %v1154
    %v1156 = vshll.u32 2475754826, %v1150
    %v1157 = vshrl.u32 2131351028, %v1151
    %v1158 = vor.u32 %v1156, %v1157
    %v1159 = vshll.u32 2131351028, %v1150
    %v1160 = vshrl.u32 2102212464, %v1151
    %v1161 = vor.u32 %v1159, %v1160
    %v1162 = vshll.u32 2102212464, %v1150
    %v1163 = vshrl.u32 920167782, %v1151
    %v1164 = vor.u32 %v1162, %v1163
    %v1165 = vshll.u32 920167782, %v1150
    %v1166 = vshrl.u32 1326507024, %v1151
    %v1167 = vor.u32 %v1165, %v1166
    %vm1168 = vcmp.lt.s32.totalorder %v1149, 1
    %vm1169 = vcmp.lt.s32.totalorder %v1149, 2
    %vm1170 = vcmp.lt.s32.totalorder %v1149, 3
    %vm1171 = vcmp.lt.s32.totalorder %v1149, 4
    %v1172 = vsel %vm1168, %v1152, %v1155
    %v1173 = vsel %vm1171, %v1161, 2102212464
    %v1174 = vsel %vm1170, %v1158, %v1173
    %v1175 = vsel %vm1169, %v1172, %v1174
    %v1176 = vsel %vm1168, %v1155, %v1158
    %v1177 = vsel %vm1171, %v1164, 920167782
    %v1178 = vsel %vm1170, %v1161, %v1177
    %v1179 = vsel %vm1169, %v1176, %v1178
    %v1180 = vsel %vm1168, %v1158, %v1161
    %v1181 = vsel %vm1171, %v1167, 1326507024
    %v1182 = vsel %vm1170, %v1164, %v1181
    %v1183 = vsel %vm1169, %v1180, %v1182
    %v1184 = vshll.u32 %v1144, 8
    %v1185 = vmul.u32.u64.compose %v1184, %v1183
    %v1186 = vextract.low.u32 %v1185
    %v1187 = vextract.high.u32 %v1185
    %v1188 = vmul.u32.u64.compose %v1184, %v1179
    %v1189 = vextract.low.u32 %v1188
    %v1190 = vextract.high.u32 %v1188
    %v1191 = vmul.u32 %v1184, %v1175
    %v1192 = vadd.s32 %v1187, %v1189
    %vm1193 = vc.u32 %v1187, %v1189
    %v1194 = vadd.s32 %v1190, 1
    %v1195 = vsel %vm1193, %v1194, %v1190
    %v1196 = vadd.s32 %v1191, %v1195
    %v1197 = vadd.s32 %v1196, 536870912
    %v1198 = vshrl.u32 %v1197, 30
    %v1199 = vshll.u32 %v1198, 30
    %v1200 = vsub.s32 %v1196, %v1199
    %vm1201 = vcmp.lt.s32.totalorder %v1200, 0
    %v1202 = vsub.s32 0, %v1200
    %v1203 = vsel %vm1201, %v1202, %v1200
    %v1204 = vclz %v1203
    %v1205 = vsub.s32 %v1204, 2
    %vm1206 = vcmp.gt.s32.totalorder 0, %v1205
    %v1207 = vsel %vm1206, 0, %v1205
    %v1208 = vsub.s32 32, %v1207
    %v1209 = vshll.u32 %v1200, %v1207
    %v1210 = vshrl.u32 %v1192, %v1208
    %v1211 = vor.u32 %v1209, %v1210
    %v1212 = vsub.s32 4294967266, %v1207
    %v1213 = vadd.s32 %v1212, 127
    %v1214 = vshll.u32 %v1213, 23
    %v1215 = vor.u32 4788187, %v1214
    %v1216 = vand.u32 2147483647, %v1215
    %v1218 = vcvt.s32.f32 %v1211
    %v1219 = vmul.f32 %v1218, %v1216
    %v1220 = vxor.u32 %v1219, 2147483648
    %v1221 = vsel %vm1138, %v1220, %v1219
    %v1222 = vsub.s32 4, %v1198
    %v1223 = vsel %vm1138, %v1222, %v1198
    %v1224 = vsel %vm1137, %v1135, %v1221
    %v1225 = vsel %vm1137, 0, %v1223
    %v1226 = vcosq.f32.pop %v1224
    %v1227 = vsinq.f32.pop %v1224
    %vm1228 = vweird.f32 %v1135
    %v1229 = vadd.s32 %v1225, 3
    %v1230 = vand.u32 %v1229, 3
    %vm1231 = vcmp.lt.s32.totalorder %v1230, 2
    %vm1232 = vcmp.eq.s32.totalorder %v1230, 0
    %v1233 = vxor.u32 %v1227, 2147483648
    %v1234 = vsel %vm1232, %v1226, %v1233
    %vm1235 = vcmp.eq.s32.totalorder %v1230, 2
    %v1236 = vxor.u32 %v1226, 2147483648
    %v1237 = vsel %vm1235, %v1236, %v1227
    %v1238 = vsel %vm1231, %v1234, %v1237
    %v1239 = vsel %vm1228, nan, %v1238
    %v1240 = vand.u32 2147483647, %v1135
    %vm1241 = vcmp.le.f32.partialorder %v1240, 0.7853982
    %vm1242 = vcmp.lt.s32.totalorder %v1135, 0
    %v1243 = vand.u32 %v1135, 2139095040
    %v1244 = vshrl.u32 %v1243, 23
    %v1245 = vsub.s32 %v1244, 127
    %v1246 = vand.u32 2147483647, %v1135
    %v1247 = vand.u32 %v1246, 8388607
    %v1248 = vor.u32 %v1247, 8388608
    %v1249 = vsub.s32 0, %v1248
    %v1250 = vadd.s32 %v1245, 1
    %vm1251 = vcmp.gt.s32.totalorder %v1250, 0
    %v1252 = vsel %vm1251, %v1250, 0
    %v1253 = vshrl.u32 %v1252, 5
    %v1254 = vand.u32 %v1252, 31
    %v1255 = vsub.s32 32, %v1254
    %v1256 = vshrl.u32 683565275, %v1255
    %v1257 = vshll.u32 683565275, %v1254
    %v1258 = vshrl.u32 2475754826, %v1255
    %v1259 = vor.u32 %v1257, %v1258
    %v1260 = vshll.u32 2475754826, %v1254
    %v1261 = vshrl.u32 2131351028, %v1255
    %v1262 = vor.u32 %v1260, %v1261
    %v1263 = vshll.u32 2131351028, %v1254
    %v1264 = vshrl.u32 2102212464, %v1255
    %v1265 = vor.u32 %v1263, %v1264
    %v1266 = vshll.u32 2102212464, %v1254
    %v1267 = vshrl.u32 920167782, %v1255
    %v1268 = vor.u32 %v1266, %v1267
    %v1269 = vshll.u32 920167782, %v1254
    %v1270 = vshrl.u32 1326507024, %v1255
    %v1271 = vor.u32 %v1269, %v1270
    %vm1272 = vcmp.lt.s32.totalorder %v1253, 1
    %vm1273 = vcmp.lt.s32.totalorder %v1253, 2
    %vm1274 = vcmp.lt.s32.totalorder %v1253, 3
    %vm1275 = vcmp.lt.s32.totalorder %v1253, 4
    %v1276 = vsel %vm1272, %v1256, %v1259
    %v1277 = vsel %vm1275, %v1265, 2102212464
    %v1278 = vsel %vm1274, %v1262, %v1277
    %v1279 = vsel %vm1273, %v1276, %v1278
    %v1280 = vsel %vm1272, %v1259, %v1262
    %v1281 = vsel %vm1275, %v1268, 920167782
    %v1282 = vsel %vm1274, %v1265, %v1281
    %v1283 = vsel %vm1273, %v1280, %v1282
    %v1284 = vsel %vm1272, %v1262, %v1265
    %v1285 = vsel %vm1275, %v1271, 1326507024
    %v1286 = vsel %vm1274, %v1268, %v1285
    %v1287 = vsel %vm1273, %v1284, %v1286
    %v1288 = vshll.u32 %v1248, 8
    %v1289 = vmul.u32.u64.compose %v1288, %v1287
    %v1290 = vextract.low.u32 %v1289
    %v1291 = vextract.high.u32 %v1289
    %v1292 = vmul.u32.u64.compose %v1288, %v1283
    %v1293 = vextract.low.u32 %v1292
    %v1294 = vextract.high.u32 %v1292
    %v1295 = vmul.u32 %v1288, %v1279
    %v1296 = vadd.s32 %v1291, %v1293
    %vm1297 = vc.u32 %v1291, %v1293
    %v1298 = vadd.s32 %v1294, 1
    %v1299 = vsel %vm1297, %v1298, %v1294
    %v1300 = vadd.s32 %v1295, %v1299
    %v1301 = vadd.s32 %v1300, 536870912
    %v1302 = vshrl.u32 %v1301, 30
    %v1303 = vshll.u32 %v1302, 30
    %v1304 = vsub.s32 %v1300, %v1303
    %vm1305 = vcmp.lt.s32.totalorder %v1304, 0
    %v1306 = vsub.s32 0, %v1304
    %v1307 = vsel %vm1305, %v1306, %v1304
    %v1308 = vclz %v1307
    %v1309 = vsub.s32 %v1308, 2
    %vm1310 = vcmp.gt.s32.totalorder 0, %v1309
    %v1311 = vsel %vm1310, 0, %v1309
    %v1312 = vsub.s32 32, %v1311
    %v1313 = vshll.u32 %v1304, %v1311
    %v1314 = vshrl.u32 %v1296, %v1312
    %v1315 = vor.u32 %v1313, %v1314
    %v1316 = vsub.s32 4294967266, %v1311
    %v1317 = vadd.s32 %v1316, 127
    %v1318 = vshll.u32 %v1317, 23
    %v1319 = vor.u32 4788187, %v1318
    %v1320 = vand.u32 2147483647, %v1319
    %v1322 = vcvt.s32.f32 %v1315
    %v1323 = vmul.f32 %v1322, %v1320
    %v1324 = vxor.u32 %v1323, 2147483648
    %v1325 = vsel %vm1242, %v1324, %v1323
    %v1326 = vsub.s32 4, %v1302
    %v1327 = vsel %vm1242, %v1326, %v1302
    %v1328 = vsel %vm1241, %v1135, %v1325
    %v1329 = vsel %vm1241, 0, %v1327
    %v1330 = vcosq.f32.pop %v1328
    %v1331 = vsinq.f32.pop %v1328
    %vm1332 = vweird.f32 %v1135
    %v1333 = vand.u32 %v1329, 3
    %vm1334 = vcmp.lt.s32.totalorder %v1333, 2
    %vm1335 = vcmp.eq.s32.totalorder %v1333, 0
    %v1336 = vxor.u32 %v1331, 2147483648
    %v1337 = vsel %vm1335, %v1330, %v1336
    %vm1338 = vcmp.eq.s32.totalorder %v1333, 2
    %v1339 = vxor.u32 %v1330, 2147483648
    %v1340 = vsel %vm1338, %v1339, %v1331
    %v1341 = vsel %vm1334, %v1337, %v1340
    %v1342 = vsel %vm1332, nan, %v1341
    %v1343 = vmul.f32 %v1342, 10.0
    %v1344 = vmul.f32 %v1239, 10.0
    %v1345 = vmul.f32 %v1107, %v1133
    %v1346 = vmul.f32 %v1108, %v1133
    %v1347 = vmul.f32 %v1109, %v1133
    %v1348 = vmul.f32 %v1110, %v1133
    %v1349 = vmul.f32 %v1111, %v1133
    %v1350 = vmul.f32 %v1344, %v1345
    %v1351 = vmul.f32 %v1344, %v1346
    %v1352 = vmul.f32 %v1344, %v1347
    %v1353 = vmul.f32 %v1344, %v1348
    %v1354 = vmul.f32 %v1344, %v1349
    %v1355 = vsel %vm678, %v1343, %v1350
    %v1356 = vsel %vm679, %v1343, %v1351
    %v1357 = vsel %vm680, %v1343, %v1352
    %v1358 = vsel %vm681, %v1343, %v1353
    %v1359 = vsel %vm682, %v1343, %v1354
    %v1360 = vmax.f32 %v1355, 0.0
    %v1361 = vmax.f32 %v1356, 0.0
    %v1362 = vmax.f32 %v1357, 0.0
    %v1363 = vmax.f32 %v1358, 0.0
    %v1364 = vmax.f32 %v1359, 0.0
    %v1365 = vmul.f32 %v1360, %v1360
    %v1366 = vmul.f32 %v1361, %v1361
    %v1367 = vmul.f32 %v1362, %v1362
    %v1368 = vmul.f32 %v1363, %v1363
    %v1369 = vmul.f32 %v1364, %v1364
    %v1370 = vsel %vm433, %v1365, 0.0
    %v1371 = vsel %vm433, %v1366, 0.0
    %v1372 = vadd.f32 %v1370, %v1371
    %v1373 = vsel %vm433, %v1367, 0.0
    %v1374 = vadd.f32 %v1372, %v1373
    %v1375 = vsel %vm433, %v1368, 0.0
    %v1376 = vadd.f32 %v1374, %v1375
    %v1377 = vsel %vm441, %v1369, 0.0
    %v1378 = vadd.f32 %v1376, %v1377
    %v1379 = vrot.slane %v1378, 4
    %v1380 = vadd.f32 %v1378, %v1379
    %v1381 = vrot.slane %v1380, 2
    %v1382 = vadd.f32 %v1380, %v1381
    %v1383 = vrot.slane %v1382, 1
    %v1384 = vadd.f32 %v1382, %v1383
    %v1385 = vmul.f32 %v1360, 10.0
    %v1386 = vmul.f32 %v1361, 10.0
    %v1387 = vmul.f32 %v1362, 10.0
    %v1388 = vmul.f32 %v1363, 10.0
    %v1389 = vmul.f32 %v1364, 10.0
    %v1390 = vmax.f32 %v1384, 1e-24
    %v1391 = vrsqrt.pop %v1390
    %v1392 = vmul.f32 %v1385, %v1391
    %v1393 = vmul.f32 %v1386, %v1391
    %v1394 = vmul.f32 %v1387, %v1391
    %v1395 = vmul.f32 %v1388, %v1391
    %v1396 = vmul.f32 %v1389, %v1391
    %v1397 = vld [vmem:[%s5] sm:$0x1]
    %v1399 = vsel %vm735, %v1397, 0
    %v1402 = vsel %vm739, %v1396, 0
    %1404 = vmatprep.subr.mxu0 0.0
    %1405 = vmatpush1.msra.mxu0 %v1392
    %1406 = vmatprep.subr.mxu0 0.0
    %1407 = vmatpush1.msra.mxu0 %v1393
    %1408 = vmatprep.subr.mxu0 0.0
    %1409 = vmatpush1.msra.mxu0 %v1394
    %1410 = vmatprep.subr.mxu0 0.0
    %1411 = vmatpush1.msra.mxu0 %v1395
    %1412 = vmatprep.subr.mxu0 0.0
    %1413 = vmatpush1.msra.mxu0 %v1402
    %1414 = vmatprep.subr.mxu0 0.0
    %1415 = vmatpush1.msra.mxu0 0.0
    %1416 = vmatprep.subr.mxu0 0.0
    %1417 = vmatpush1.msra.mxu0 0.0
    %1418 = vmatprep.subr.mxu0 0.0
    %1419 = vmatpush1.msra.mxu0 0.0
    %1420 = vmatprep.subr.mxu0 0.0
    %1421 = vmatpush1.msra.mxu0 0.0
    %1422 = vmatprep.subr.mxu0 0.0
    %1423 = vmatpush1.msra.mxu0 0.0
    %1424 = vmatprep.subr.mxu0 0.0
    %1425 = vmatpush1.msra.mxu0 0.0
    %1426 = vmatprep.subr.mxu0 0.0
    %1427 = vmatpush1.msra.mxu0 0.0
    %1428 = vmatprep.subr.mxu0 0.0
    %1429 = vmatpush1.msra.mxu0 0.0
    %1430 = vmatprep.subr.mxu0 0.0
    %1431 = vmatpush1.msra.mxu0 0.0
    %1432 = vmatprep.subr.mxu0 0.0
    %1433 = vmatpush1.msra.mxu0 0.0
    %1434 = vmatprep.subr.mxu0 0.0
    %1435 = vmatpush1.msra.mxu0 0.0
    %1436 = vmatprep.subr.mxu0 0.0
    %1437 = vmatpush1.msra.mxu0 0.0
    %1438 = vmatprep.subr.mxu0 0.0
    %1439 = vmatpush1.msra.mxu0 0.0
    %1440 = vmatprep.subr.mxu0 0.0
    %1441 = vmatpush1.msra.mxu0 0.0
    %1442 = vmatprep.subr.mxu0 0.0
    %1443 = vmatpush1.msra.mxu0 0.0
    %1444 = vmatprep.subr.mxu0 0.0
    %1445 = vmatpush1.msra.mxu0 0.0
    %1446 = vmatprep.subr.mxu0 0.0
    %1447 = vmatpush1.msra.mxu0 0.0
    %1448 = vmatprep.subr.mxu0 0.0
    %1449 = vmatpush1.msra.mxu0 0.0
    %1450 = vmatprep.subr.mxu0 0.0
    %1451 = vmatpush1.msra.mxu0 0.0
    %1452 = vmatprep.subr.mxu0 0.0
    %1453 = vmatpush1.msra.mxu0 0.0
    %1454 = vmatprep.subr.mxu0 0.0
    %1455 = vmatpush1.msra.mxu0 0.0
    %1456 = vmatprep.subr.mxu0 0.0
    %1457 = vmatpush1.msra.mxu0 0.0
    %1458 = vmatprep.subr.mxu0 0.0
    %1459 = vmatpush1.msra.mxu0 0.0
    %1460 = vmatprep.subr.mxu0 0.0
    %1461 = vmatpush1.msra.mxu0 0.0
    %1462 = vmatprep.subr.mxu0 0.0
    %1463 = vmatpush1.msra.mxu0 0.0
    %1464 = vmatprep.subr.mxu0 0.0
    %1465 = vmatpush1.msra.mxu0 0.0
    %1466 = vmatprep.subr.mxu0 0.0
    %1467 = vmatpush1.msra.mxu0 0.0
    %1468 = vmatprep.mubr.f32.mxu0 0.0
    %1469 = vmatmul.mubr.f32.gmra.mrb[0].mxu0 %v1399
    %v1470 = vpop.f32.mrb[0].mxu0
    %v1471 = vadd.f32 0.0, %v1470
    %v1472 = vpop.f32.mrb[0].mxu0
    %1473 = vdwg.mxu0
    %v1474 = vmul.f32 %v1471, 0.5
    %v1475 = vtanh.pop %v1474
    %v1476 = vadd.f32 %v1475, 1.0
    %v1477 = vmul.f32 %v1476, 0.5
    %1478 = vst.msk [vmem:[#allocation2] sm:$0x1] %vm441, %v1477
    // Predicated region
    $region26: #{tpu_custom_call.1} parent=1 // pred_check
      _
    $region27: #{tpu_custom_call.1} parent=1 // pred_check_branch
      %1480 = sbr.rel (0) target = $region29
    $region28: #{tpu_custom_call.1} parent=1 // pred_region
      %s1482 = ssub.s32 16, 16
      %1483 = vsyncadd [#allocation3], %s1482
      %s1485 = sshll.u32 [#allocation2], 4
      %s1486 = int_to_ptr.vmem [resolvable:$true] %s1485
      %1488 = dma.vmem_to_hbm [thread:$0]  %s1486, 16, %s6, [#allocation3]
    $region29: #{tpu_custom_call.1} parent=1 // pred_fallthru
      _
    // Predicated region
    $region30: #{tpu_custom_call.1} parent=1 // pred_check
      _
    $region31: #{tpu_custom_call.1} parent=1 // pred_check_branch
      %1490 = sbr.rel (0) target = $region33
    $region32: #{tpu_custom_call.1} parent=1 // pred_region
      %1491 = dma.done [#allocation3], 16
    $region33: #{tpu_custom_call.1} parent=1 // pred_fallthru
      _
    %1492 = vsyncpa [#allocation3], 1

</llo_original>
